<compile_context>
chip_gen: v7x
topology: tpu7x:2x2x1
jax: 0.10.0
libtpu: 0.0.40
codegen_flags: <defaults>
</compile_context>

<pallas_src>
import functools

import jax
import jax.numpy as jnp
from jax.experimental import pallas as pl
from jax.experimental.pallas import tpu as pltpu

LN_EPS = 1e-5     # nn.LayerNorm default (ln1, channel-wise per frame)
# TODO(synk): set GLN_EPS to the eps of the reference GlobalLayerNorm (Conv-TasNet style
# implementations commonly use 1e-8; change here if the reference uses 1e-5).
GLN_EPS = 1e-8

# Column layout inside the packed per-stack small-param slab (PMAX, n_blocks * NCOL).
COL_B1, COL_G1, COL_BE1 = 0, 1, 2
COL_DW0, COL_DW1, COL_DW2 = 3, 4, 5
COL_DB, COL_G2, COL_BE2 = 6, 7, 8
COL_B2, COL_A1, COL_A2 = 9, 10, 11
NCOL = 12


# ----------------------------------------------------------------------------- kernel

def _gln(h, g, b):
    """Global layer norm over the whole (C, T) tile.

    Two-pass statistics (better f32 accuracy than E[x^2]-E[x]^2) and a 2-op per-element
    affine: d * scale + b.
    """
    mu = jnp.mean(jnp.mean(h, axis=1, keepdims=True), axis=0, keepdims=True)       # (1, 1)
    d = h - mu
    var = jnp.mean(jnp.mean(d * d, axis=1, keepdims=True), axis=0, keepdims=True)  # (1, 1)
    scale = g * jax.lax.rsqrt(var + GLN_EPS)                                        # (C, 1)
    return d * scale + b


def fused_stack_kernel(x_ref, gvec_ref, gw_ref, w1a_ref, w2_ref, bvec_ref, rb_ref,
                       o_ref, y_scr,
                       *, n_channels, hidden_channels, n_blocks, T):
    N, H = n_channels, hidden_channels
    s = pl.program_id(1)
    gv = gvec_ref[...]                                          # (PMAX, 4) f32

    # ---- ln1 (LayerNorm over channels, per time step) + 1x1 conv: only at the first stack
    @pl.when(s == 0)
    def _():
        x = x_ref[...].astype(jnp.float32)                      # (N, T)
        mu = jnp.mean(x, axis=0, keepdims=True)
        var = jnp.mean((x - mu) ** 2, axis=0, keepdims=True)    # biased, like nn.LayerNorm
        y0 = (x - mu) * jax.lax.rsqrt(var + LN_EPS)
        y0 = y0 * gv[:N, 0:1] + gv[:N, 1:2]
        y_scr[...] = (jnp.dot(gw_ref[0], y0.astype(jnp.bfloat16),
                              preferred_element_type=jnp.float32) + gv[:N, 2:3])

    y = y_scr[...]                                              # (N, T) f32, carried across stacks
    bv = bvec_ref[...]                                          # (PMAX, n_blocks * NCOL) f32
    rb = rb_ref[...]                                            # (H, 1) folded speaker bias
    t_idx = jax.lax.broadcasted_iota(jnp.int32, (1, T), 1)      # (1, T) boundary iota

    # ---- the n_blocks TCN blocks of this stack (static unroll -> static dilations)
    for i in range(n_blocks):
        d = 2 ** i                                              # dilation of block i

        def col(c, rows=H, _i=i):
            k = _i * NCOL + c
            return bv[:rows, k:k + 1]

        # 1x1 conv N -> H (bf16 MXU operands, f32 accumulate)
        h = (jnp.dot(w1a_ref[i], y.astype(jnp.bfloat16),
                     preferred_element_type=jnp.float32) + col(COL_B1))
        if i == 0:                                              # TCNBlockRef: speaker embedding
            h = h + rb                                          # folded into a per-batch bias

        # PReLU + gLN
        h = jnp.where(h >= 0.0, h, col(COL_A1) * h)
        h = _gln(h, col(COL_G1), col(COL_BE1))

        # Depthwise dilated conv, kernel_size=3, 'same' padding = dilation.
        left = jnp.where(t_idx >= d, pltpu.roll(h, shift=d, axis=1), 0.0)          # h[t - d]
        right = jnp.where(t_idx < T - d, pltpu.roll(h, shift=T - d, axis=1), 0.0)  # h[t + d]
        h = (col(COL_DW0) * left + col(COL_DW1) * h + col(COL_DW2) * right
             + col(COL_DB))

        # PReLU + gLN
        h = jnp.where(h >= 0.0, h, col(COL_A2) * h)
        h = _gln(h, col(COL_G2), col(COL_BE2))

        # 1x1 conv H -> N + residual
        y = (y + jnp.dot(w2_ref[i], h.astype(jnp.bfloat16),
                         preferred_element_type=jnp.float32) + col(COL_B2, N))

    y_scr[...] = y                                              # carry to the next stack

    # ---- mask head: relu(conv1x1(y)) * x, only at the last stack
    @pl.when(s == pl.num_programs(1) - 1)
    def _():
        x = x_ref[...].astype(jnp.float32)
        m = jnp.dot(gw_ref[1], y.astype(jnp.bfloat16),
                    preferred_element_type=jnp.float32) + gv[:N, 3:4]
        o_ref[...] = (x * jnp.maximum(m, 0.0)).astype(o_ref.dtype)


# ----------------------------------------------------------------------------- wrapper

def _vmem_limit_bytes():
    """Generation-aware VMEM budget: ~75% of per-core VMEM (~48 MiB v7x, ~96 MiB v5e/v6e)."""
    cap = 64 * 1024 * 1024
    try:
        cap = int(pltpu.get_tpu_info().vmem_capacity_bytes)
    except Exception:
        pass
    return max(32 * 1024 * 1024, min(cap * 3 // 4, 100 * 1024 * 1024))


def speaker_extractor_short(x, ref, packed, *, hidden_channels, n_stacks, n_blocks):
    """x: (B, N, T) encoder features, ref: (B, O) speaker embedding."""
    B, N, T = x.shape
    H = hidden_channels
    assert 2 ** (n_blocks - 1) < T, "boundary masks assume dilation < T"

    gvec, gw, w1a, w2, bvec, w1b = (packed[k] for k in
                                    ("gvec", "gw", "w1a", "w2", "bvec", "w1b"))
    PMAX = gvec.shape[0]

    # Fold the speaker embedding into a per-(batch, stack) bias for the first block of each
    # stack (replaces the TCNBlockRef channel-concat). Tiny XLA einsum outside the kernel.
    rb = jnp.einsum("sho,bo->bsh", w1b, ref.astype(jnp.float32))[..., None]  # (B, S, H, 1)

    kernel = functools.partial(
        fused_stack_kernel,
        n_channels=N, hidden_channels=H, n_blocks=n_blocks, T=T)

    return pl.pallas_call(
        kernel,
        out_shape=jax.ShapeDtypeStruct((B, N, T), x.dtype),
        grid=(B, n_stacks),
        in_specs=[
            pl.BlockSpec((None, N, T), lambda b, s: (b, 0, 0)),                   # x (resident per b)
            pl.BlockSpec(gvec.shape, lambda b, s: (0, 0)),                        # ln1/conv1/mask1 vecs
            pl.BlockSpec(gw.shape, lambda b, s: (0, 0, 0)),                       # conv1_w / mask1_w
            pl.BlockSpec((None, n_blocks, H, N), lambda b, s: (s, 0, 0, 0)),      # w1a, streamed per stack
            pl.BlockSpec((None, n_blocks, N, H), lambda b, s: (s, 0, 0, 0)),      # w2, streamed per stack
            pl.BlockSpec((None, PMAX, n_blocks * NCOL), lambda b, s: (s, 0, 0)),  # packed small params
            pl.BlockSpec((None, None, H, 1), lambda b, s: (b, s, 0, 0)),          # folded speaker bias
        ],
        out_specs=pl.BlockSpec((None, N, T), lambda b, s: (b, 0, 0)),
        scratch_shapes=[pltpu.VMEM((N, T), jnp.float32)],                         # y carried over stacks
        compiler_params=pltpu.CompilerParams(
            dimension_semantics=("parallel", "arbitrary"),   # batch across TCs, stacks sequential
            vmem_limit_bytes=_vmem_limit_bytes(),
        ),
    )(x, gvec, gw, w1a, w2, bvec, rb)


# ----------------------------------------------------------------------------- params

def init_params(key, n_channels, hidden_channels, out_channels, n_stacks, n_blocks):
    """Natural (PyTorch-like) parameter shapes."""
    N, H, O = n_channels, hidden_channels, out_channels
    keys = iter(jax.random.split(key, 2 + n_stacks * n_blocks * 3 + 2))

    def w(shape):
        return jax.random.normal(next(keys), shape, jnp.float32) * 0.1

    params = {
        "ln1_g": jnp.ones((N,), jnp.float32),
        "ln1_b": jnp.zeros((N,), jnp.float32),
        "conv1_w": w((N, N)),
        "conv1_b": jnp.zeros((N,), jnp.float32),
        "mask1_w": w((N, N)),
        "mask1_b": jnp.zeros((N,), jnp.float32),
        "stacks": [],
    }
    for _ in range(n_stacks):
        stack = []
        for i in range(n_blocks):
            cin = N + O if i == 0 else N      # TCNBlockRef concatenates the ref embedding
            stack.append({
                "w1": w((H, cin)),
                "b1": jnp.zeros((H,), jnp.float32),
                "a1": jnp.array(0.25, jnp.float32),   # PyTorch PReLU default (1 param)
                "g1": jnp.ones((H,), jnp.float32),
                "be1": jnp.zeros((H,), jnp.float32),
                "dw": w((H, 3)),                       # depthwise k=3 taps
                "db": jnp.zeros((H,), jnp.float32),
                "a2": jnp.array(0.25, jnp.float32),
                "g2": jnp.ones((H,), jnp.float32),
                "be2": jnp.zeros((H,), jnp.float32),
                "w2": w((N, H)),
                "b2": jnp.zeros((N,), jnp.float32),
            })
        params["stacks"].append(stack)
    return params


def pack_params(p, n_channels, hidden_channels, out_channels, n_stacks, n_blocks):
    """One-time host-side packing: bf16 matmul weights, per-stack small-param slabs."""
    N, H, O = n_channels, hidden_channels, out_channels
    PMAX = max(N, H)

    gvec = jnp.zeros((PMAX, 4), jnp.float32)
    gvec = gvec.at[:N, 0].set(p["ln1_g"]).at[:N, 1].set(p["ln1_b"])
    gvec = gvec.at[:N, 2].set(p["conv1_b"]).at[:N, 3].set(p["mask1_b"])

    gw = jnp.stack([p["conv1_w"], p["mask1_w"]], axis=0).astype(jnp.bfloat16)   # (2, N, N)

    w1a = jnp.zeros((n_stacks, n_blocks, H, N), jnp.float32)
    w1b = jnp.zeros((n_stacks, H, O), jnp.float32)
    w2 = jnp.zeros((n_stacks, n_blocks, N, H), jnp.float32)
    bvec = jnp.zeros((n_stacks, PMAX, n_blocks * NCOL), jnp.float32)

    for s in range(n_stacks):
        for i in range(n_blocks):
            blk = p["stacks"][s][i]
            w1 = blk["w1"]
            w1a = w1a.at[s, i].set(w1[:, :N])
            if i == 0:
                w1b = w1b.at[s].set(w1[:, N:])        # speaker part -> folded bias (wrapper)
            w2 = w2.at[s, i].set(blk["w2"])

            c0 = i * NCOL
            bvec = bvec.at[s, :H, c0 + COL_B1].set(blk["b1"])
            bvec = bvec.at[s, :H, c0 + COL_G1].set(blk["g1"])
            bvec = bvec.at[s, :H, c0 + COL_BE1].set(blk["be1"])
            bvec = bvec.at[s, :H, c0 + COL_DW0].set(blk["dw"][:, 0])
            bvec = bvec.at[s, :H, c0 + COL_DW1].set(blk["dw"][:, 1])
            bvec = bvec.at[s, :H, c0 + COL_DW2].set(blk["dw"][:, 2])
            bvec = bvec.at[s, :H, c0 + COL_DB].set(blk["db"])
            bvec = bvec.at[s, :H, c0 + COL_G2].set(blk["g2"])
            bvec = bvec.at[s, :H, c0 + COL_BE2].set(blk["be2"])
            bvec = bvec.at[s, :N, c0 + COL_B2].set(blk["b2"])
            bvec = bvec.at[s, :, c0 + COL_A1].set(blk["a1"])   # scalar PReLU broadcast
            bvec = bvec.at[s, :, c0 + COL_A2].set(blk["a2"])

    return {"gvec": gvec, "gw": gw,
            "w1a": w1a.astype(jnp.bfloat16), "w2": w2.astype(jnp.bfloat16),
            "w1b": w1b, "bvec": bvec}


# ----------------------------------------------------------------------------- main

if __name__ == "__main__":
    B = 2          # batch (>=2 keeps both v7x TensorCores busy)
    N = 16         # n_channels
    H = 32         # hidden_channels
    O = 16         # out_channels (speaker embedding / ref dim)
    T = 128        # time frames (production: use a large multiple of 128)
    n_stacked, n_tcn = 2, 2   # n_stacked_tcnblocks, n_tcnblocks (dilations 1, 2)

    key = jax.random.PRNGKey(0)
    k_x, k_r, k_p = jax.random.split(key, 3)
    x = jax.random.normal(k_x, (B, N, T), jnp.float32)
    ref = jax.random.normal(k_r, (B, O), jnp.float32)
    params = init_params(k_p, N, H, O, n_stacked, n_tcn)
    packed = pack_params(params, N, H, O, n_stacked, n_tcn)

    out = speaker_extractor_short(x, ref, packed,
                                  hidden_channels=H, n_stacks=n_stacked, n_blocks=n_tcn)
    jax.block_until_ready(out)
    assert out.shape == (B, N, T) and out.dtype == jnp.float32
    print("KERNEL_OK")
</pallas_src>

<mosaic_0001>
module attributes {stable_mosaic.version = 11 : i64} {
  func.func @fused_stack_kernel(%arg0: i32, %arg1: i32, %arg2: memref<1x16x128xf32, #tpu.memory_space<vmem>>, %arg3: memref<32x4xf32, #tpu.memory_space<vmem>>, %arg4: memref<2x16x16xbf16, #tpu.memory_space<vmem>>, %arg5: memref<1x2x32x16xbf16, #tpu.memory_space<vmem>>, %arg6: memref<1x2x16x32xbf16, #tpu.memory_space<vmem>>, %arg7: memref<1x32x24xf32, #tpu.memory_space<vmem>>, %arg8: memref<1x1x32x1xf32, #tpu.memory_space<vmem>>, %arg9: memref<1x16x128xf32, #tpu.memory_space<vmem>>, %arg10: memref<16x128xf32, #tpu.memory_space<vmem>>) attributes {dimension_semantics = [#tpu.dimension_semantics<parallel>, #tpu.dimension_semantics<arbitrary>], iteration_bounds = array<i64: 2, 2>, scalar_prefetch = 0 : i64, scratch_operands = 1 : i64, tpu.core_type = #tpu.core_type<tc>, window_params = [{transform_indices = @transform_0, window_bounds = array<i64: 1, 16, 128>}, {pipeline_mode = #tpu.pipeline_mode<synchronous>, transform_indices = @transform_1, window_bounds = array<i64: 32, 4>}, {pipeline_mode = #tpu.pipeline_mode<synchronous>, transform_indices = @transform_2, window_bounds = array<i64: 2, 16, 16>}, {transform_indices = @transform_3, window_bounds = array<i64: 1, 2, 32, 16>}, {transform_indices = @transform_4, window_bounds = array<i64: 1, 2, 16, 32>}, {transform_indices = @transform_5, window_bounds = array<i64: 1, 32, 24>}, {transform_indices = @transform_6, window_bounds = array<i64: 1, 1, 32, 1>}, {transform_indices = @transform_7, window_bounds = array<i64: 1, 16, 128>}]} {
    %c0 = arith.constant 0 : index
    %c0_0 = arith.constant 0 : index
    %0 = vector.load %arg3[%c0, %c0_0] : memref<32x4xf32, #tpu.memory_space<vmem>>, vector<32x4xf32>
    %c0_i32 = arith.constant 0 : i32
    %1 = arith.cmpi eq, %arg1, %c0_i32 : i32
    %2 = arith.extui %1 : i1 to i32
    %c0_i32_1 = arith.constant 0 : i32
    %3 = arith.cmpi ne, %2, %c0_i32_1 : i32
    scf.if %3 {
      %c0_81 = arith.constant 0 : index
      %c0_82 = arith.constant 0 : index
      %c0_83 = arith.constant 0 : index
      %246 = vector.load %arg2[%c0_81, %c0_82, %c0_83] : memref<1x16x128xf32, #tpu.memory_space<vmem>>, vector<1x16x128xf32>
      %247 = vector.shape_cast %246 : vector<1x16x128xf32> to vector<16x128xf32>
      %cst_84 = arith.constant dense<0.000000e+00> : vector<128xf32>
      %248 = vector.multi_reduction <add>, %247, %cst_84 [0] : vector<16x128xf32> to vector<128xf32>
      %249 = vector.shape_cast %248 : vector<128xf32> to vector<1x128xf32>
      %cst_85 = arith.constant 1.600000e+01 : f32
      %250 = vector.broadcast %cst_85 : f32 to vector<1x128xf32>
      %251 = arith.divf %249, %250 : vector<1x128xf32>
      %252 = vector.broadcast %251 : vector<1x128xf32> to vector<16x128xf32>
      %253 = arith.subf %247, %252 : vector<16x128xf32>
      %254 = arith.mulf %253, %253 : vector<16x128xf32>
      %cst_86 = arith.constant dense<0.000000e+00> : vector<128xf32>
      %255 = vector.multi_reduction <add>, %254, %cst_86 [0] : vector<16x128xf32> to vector<128xf32>
      %256 = vector.shape_cast %255 : vector<128xf32> to vector<1x128xf32>
      %cst_87 = arith.constant 1.600000e+01 : f32
      %257 = vector.broadcast %cst_87 : f32 to vector<1x128xf32>
      %258 = arith.divf %256, %257 : vector<1x128xf32>
      %259 = vector.broadcast %251 : vector<1x128xf32> to vector<16x128xf32>
      %260 = arith.subf %247, %259 : vector<16x128xf32>
      %cst_88 = arith.constant 9.99999974E-6 : f32
      %261 = vector.broadcast %cst_88 : f32 to vector<1x128xf32>
      %262 = arith.addf %258, %261 : vector<1x128xf32>
      %263 = math.rsqrt %262 : vector<1x128xf32>
      %264 = vector.broadcast %263 : vector<1x128xf32> to vector<16x128xf32>
      %265 = arith.mulf %260, %264 : vector<16x128xf32>
      %266 = vector.extract_strided_slice %0 {offsets = [0, 0], sizes = [16, 1], strides = [1, 1]} : vector<32x4xf32> to vector<16x1xf32>
      %267 = vector.broadcast %266 : vector<16x1xf32> to vector<16x128xf32>
      %268 = arith.mulf %265, %267 : vector<16x128xf32>
      %269 = vector.extract_strided_slice %0 {offsets = [0, 1], sizes = [16, 1], strides = [1, 1]} : vector<32x4xf32> to vector<16x1xf32>
      %270 = vector.broadcast %269 : vector<16x1xf32> to vector<16x128xf32>
      %271 = arith.addf %268, %270 : vector<16x128xf32>
      %c0_89 = arith.constant 0 : index
      %c0_90 = arith.constant 0 : index
      %c0_91 = arith.constant 0 : index
      %272 = vector.load %arg4[%c0_89, %c0_90, %c0_91] : memref<2x16x16xbf16, #tpu.memory_space<vmem>>, vector<1x16x16xbf16>
      %273 = vector.shape_cast %272 : vector<1x16x16xbf16> to vector<16x16xbf16>
      %274 = arith.truncf %271 : vector<16x128xf32> to vector<16x128xbf16>
      %cst_92 = arith.constant dense<0.000000e+00> : vector<16x128xf32>
      %275 = tpu.matmul %273, %274, %cst_92 {dimension_numbers = #tpu.dot_dimension_numbers<[1], [0], [0], [1], [0, 0, 1, 1], [], []>} : vector<16x16xbf16>, vector<16x128xbf16>, vector<16x128xf32> -> vector<16x128xf32>
      %276 = vector.extract_strided_slice %0 {offsets = [0, 2], sizes = [16, 1], strides = [1, 1]} : vector<32x4xf32> to vector<16x1xf32>
      %277 = vector.broadcast %276 : vector<16x1xf32> to vector<16x128xf32>
      %278 = arith.addf %275, %277 : vector<16x128xf32>
      %c0_93 = arith.constant 0 : index
      %c0_94 = arith.constant 0 : index
      %279 = vector.load %arg10[%c0_93, %c0_94] : memref<16x128xf32, #tpu.memory_space<vmem>>, vector<16x128xf32>
      tpu.vector_store %arg10[%c0_93, %c0_94], %278 {strides = array<i32>} : memref<16x128xf32, #tpu.memory_space<vmem>>, vector<16x128xf32>,
    } else {
    }
    %c0_2 = arith.constant 0 : index
    %c0_3 = arith.constant 0 : index
    %4 = vector.load %arg10[%c0_2, %c0_3] : memref<16x128xf32, #tpu.memory_space<vmem>>, vector<16x128xf32>
    %c0_4 = arith.constant 0 : index
    %c0_5 = arith.constant 0 : index
    %c0_6 = arith.constant 0 : index
    %5 = vector.load %arg7[%c0_4, %c0_5, %c0_6] : memref<1x32x24xf32, #tpu.memory_space<vmem>>, vector<1x32x24xf32>
    %6 = vector.shape_cast %5 : vector<1x32x24xf32> to vector<32x24xf32>
    %c0_7 = arith.constant 0 : index
    %c0_8 = arith.constant 0 : index
    %c0_9 = arith.constant 0 : index
    %c0_10 = arith.constant 0 : index
    %7 = vector.load %arg8[%c0_7, %c0_8, %c0_9, %c0_10] : memref<1x1x32x1xf32, #tpu.memory_space<vmem>>, vector<1x1x32x1xf32>
    %8 = vector.shape_cast %7 : vector<1x1x32x1xf32> to vector<32x1xf32>
    %9 = tpu.iota {dimensions = array<i32: 1>} : vector<1x128xi32>
    %c0_11 = arith.constant 0 : index
    %c0_12 = arith.constant 0 : index
    %c0_13 = arith.constant 0 : index
    %c0_14 = arith.constant 0 : index
    %10 = vector.load %arg5[%c0_11, %c0_12, %c0_13, %c0_14] : memref<1x2x32x16xbf16, #tpu.memory_space<vmem>>, vector<1x1x32x16xbf16>
    %11 = vector.shape_cast %10 : vector<1x1x32x16xbf16> to vector<32x16xbf16>
    %12 = arith.truncf %4 : vector<16x128xf32> to vector<16x128xbf16>
    %cst = arith.constant dense<0.000000e+00> : vector<32x128xf32>
    %13 = tpu.matmul %11, %12, %cst {dimension_numbers = #tpu.dot_dimension_numbers<[1], [0], [0], [1], [0, 0, 1, 1], [], []>} : vector<32x16xbf16>, vector<16x128xbf16>, vector<32x128xf32> -> vector<32x128xf32>
    %14 = vector.extract_strided_slice %6 {offsets = [0, 0], sizes = [32, 1], strides = [1, 1]} : vector<32x24xf32> to vector<32x1xf32>
    %15 = vector.broadcast %14 : vector<32x1xf32> to vector<32x128xf32>
    %16 = arith.addf %13, %15 : vector<32x128xf32>
    %17 = vector.broadcast %8 : vector<32x1xf32> to vector<32x128xf32>
    %18 = arith.addf %16, %17 : vector<32x128xf32>
    %cst_15 = arith.constant 0.000000e+00 : f32
    %19 = vector.broadcast %cst_15 : f32 to vector<32x128xf32>
    %20 = arith.cmpf oge, %18, %19 : vector<32x128xf32>
    %21 = vector.extract_strided_slice %6 {offsets = [0, 10], sizes = [32, 1], strides = [1, 1]} : vector<32x24xf32> to vector<32x1xf32>
    %22 = vector.broadcast %21 : vector<32x1xf32> to vector<32x128xf32>
    %23 = arith.mulf %22, %18 : vector<32x128xf32>
    %24 = arith.select %20, %18, %23 : vector<32x128xi1>, vector<32x128xf32>
    %25 = vector.extract_strided_slice %6 {offsets = [0, 1], sizes = [32, 1], strides = [1, 1]} : vector<32x24xf32> to vector<32x1xf32>
    %26 = vector.extract_strided_slice %6 {offsets = [0, 2], sizes = [32, 1], strides = [1, 1]} : vector<32x24xf32> to vector<32x1xf32>
    %cst_16 = arith.constant dense<0.000000e+00> : vector<32xf32>
    %27 = vector.multi_reduction <add>, %24, %cst_16 [1] : vector<32x128xf32> to vector<32xf32>
    %28 = vector.shape_cast %27 : vector<32xf32> to vector<32x1xf32>
    %cst_17 = arith.constant 1.280000e+02 : f32
    %29 = vector.broadcast %cst_17 : f32 to vector<32x1xf32>
    %30 = arith.divf %28, %29 : vector<32x1xf32>
    %cst_18 = arith.constant dense<0.000000e+00> : vector<1xf32>
    %31 = vector.multi_reduction <add>, %30, %cst_18 [0] : vector<32x1xf32> to vector<1xf32>
    %32 = vector.shape_cast %31 : vector<1xf32> to vector<1x1xf32>
    %cst_19 = arith.constant 3.200000e+01 : f32
    %33 = vector.broadcast %cst_19 : f32 to vector<1x1xf32>
    %34 = arith.divf %32, %33 : vector<1x1xf32>
    %35 = vector.broadcast %34 : vector<1x1xf32> to vector<32x128xf32>
    %36 = arith.subf %24, %35 : vector<32x128xf32>
    %37 = arith.mulf %36, %36 : vector<32x128xf32>
    %cst_20 = arith.constant dense<0.000000e+00> : vector<32xf32>
    %38 = vector.multi_reduction <add>, %37, %cst_20 [1] : vector<32x128xf32> to vector<32xf32>
    %39 = vector.shape_cast %38 : vector<32xf32> to vector<32x1xf32>
    %cst_21 = arith.constant 1.280000e+02 : f32
    %40 = vector.broadcast %cst_21 : f32 to vector<32x1xf32>
    %41 = arith.divf %39, %40 : vector<32x1xf32>
    %cst_22 = arith.constant dense<0.000000e+00> : vector<1xf32>
    %42 = vector.multi_reduction <add>, %41, %cst_22 [0] : vector<32x1xf32> to vector<1xf32>
    %43 = vector.shape_cast %42 : vector<1xf32> to vector<1x1xf32>
    %cst_23 = arith.constant 3.200000e+01 : f32
    %44 = vector.broadcast %cst_23 : f32 to vector<1x1xf32>
    %45 = arith.divf %43, %44 : vector<1x1xf32>
    %cst_24 = arith.constant 9.99999993E-9 : f32
    %46 = vector.broadcast %cst_24 : f32 to vector<1x1xf32>
    %47 = arith.addf %45, %46 : vector<1x1xf32>
    %48 = math.rsqrt %47 : vector<1x1xf32>
    %49 = vector.broadcast %48 : vector<1x1xf32> to vector<32x1xf32>
    %50 = arith.mulf %25, %49 : vector<32x1xf32>
    %51 = vector.broadcast %50 : vector<32x1xf32> to vector<32x128xf32>
    %52 = arith.mulf %36, %51 : vector<32x128xf32>
    %53 = vector.broadcast %26 : vector<32x1xf32> to vector<32x128xf32>
    %54 = arith.addf %52, %53 : vector<32x128xf32>
    %c1_i32 = arith.constant 1 : i32
    %55 = vector.broadcast %c1_i32 : i32 to vector<1x128xi32>
    %56 = arith.cmpi sge, %9, %55 : vector<1x128xi32>
    %c1_i32_25 = arith.constant 1 : i32
    %57 = tpu.dynamic_rotate %54 by %c1_i32_25 dim 1 : vector<32x128xf32>, i32 -> vector<32x128xf32>
    %cst_26 = arith.constant 0.000000e+00 : f32
    %58 = vector.shape_cast %56 : vector<1x128xi1> to vector<1x128xi1>
    %59 = vector.broadcast %58 : vector<1x128xi1> to vector<32x128xi1>
    %60 = vector.broadcast %cst_26 : f32 to vector<32x128xf32>
    %61 = arith.select %59, %57, %60 : vector<32x128xi1>, vector<32x128xf32>
    %c127_i32 = arith.constant 127 : i32
    %62 = vector.broadcast %c127_i32 : i32 to vector<1x128xi32>
    %63 = arith.cmpi slt, %9, %62 : vector<1x128xi32>
    %c127_i32_27 = arith.constant 127 : i32
    %64 = tpu.dynamic_rotate %54 by %c127_i32_27 dim 1 : vector<32x128xf32>, i32 -> vector<32x128xf32>
    %cst_28 = arith.constant 0.000000e+00 : f32
    %65 = vector.shape_cast %63 : vector<1x128xi1> to vector<1x128xi1>
    %66 = vector.broadcast %65 : vector<1x128xi1> to vector<32x128xi1>
    %67 = vector.broadcast %cst_28 : f32 to vector<32x128xf32>
    %68 = arith.select %66, %64, %67 : vector<32x128xi1>, vector<32x128xf32>
    %69 = vector.extract_strided_slice %6 {offsets = [0, 3], sizes = [32, 1], strides = [1, 1]} : vector<32x24xf32> to vector<32x1xf32>
    %70 = vector.broadcast %69 : vector<32x1xf32> to vector<32x128xf32>
    %71 = arith.mulf %70, %61 : vector<32x128xf32>
    %72 = vector.extract_strided_slice %6 {offsets = [0, 4], sizes = [32, 1], strides = [1, 1]} : vector<32x24xf32> to vector<32x1xf32>
    %73 = vector.broadcast %72 : vector<32x1xf32> to vector<32x128xf32>
    %74 = arith.mulf %73, %54 : vector<32x128xf32>
    %75 = arith.addf %71, %74 : vector<32x128xf32>
    %76 = vector.extract_strided_slice %6 {offsets = [0, 5], sizes = [32, 1], strides = [1, 1]} : vector<32x24xf32> to vector<32x1xf32>
    %77 = vector.broadcast %76 : vector<32x1xf32> to vector<32x128xf32>
    %78 = arith.mulf %77, %68 : vector<32x128xf32>
    %79 = arith.addf %75, %78 : vector<32x128xf32>
    %80 = vector.extract_strided_slice %6 {offsets = [0, 6], sizes = [32, 1], strides = [1, 1]} : vector<32x24xf32> to vector<32x1xf32>
    %81 = vector.broadcast %80 : vector<32x1xf32> to vector<32x128xf32>
    %82 = arith.addf %79, %81 : vector<32x128xf32>
    %cst_29 = arith.constant 0.000000e+00 : f32
    %83 = vector.broadcast %cst_29 : f32 to vector<32x128xf32>
    %84 = arith.cmpf oge, %82, %83 : vector<32x128xf32>
    %85 = vector.extract_strided_slice %6 {offsets = [0, 11], sizes = [32, 1], strides = [1, 1]} : vector<32x24xf32> to vector<32x1xf32>
    %86 = vector.broadcast %85 : vector<32x1xf32> to vector<32x128xf32>
    %87 = arith.mulf %86, %82 : vector<32x128xf32>
    %88 = arith.select %84, %82, %87 : vector<32x128xi1>, vector<32x128xf32>
    %89 = vector.extract_strided_slice %6 {offsets = [0, 7], sizes = [32, 1], strides = [1, 1]} : vector<32x24xf32> to vector<32x1xf32>
    %90 = vector.extract_strided_slice %6 {offsets = [0, 8], sizes = [32, 1], strides = [1, 1]} : vector<32x24xf32> to vector<32x1xf32>
    %cst_30 = arith.constant dense<0.000000e+00> : vector<32xf32>
    %91 = vector.multi_reduction <add>, %88, %cst_30 [1] : vector<32x128xf32> to vector<32xf32>
    %92 = vector.shape_cast %91 : vector<32xf32> to vector<32x1xf32>
    %cst_31 = arith.constant 1.280000e+02 : f32
    %93 = vector.broadcast %cst_31 : f32 to vector<32x1xf32>
    %94 = arith.divf %92, %93 : vector<32x1xf32>
    %cst_32 = arith.constant dense<0.000000e+00> : vector<1xf32>
    %95 = vector.multi_reduction <add>, %94, %cst_32 [0] : vector<32x1xf32> to vector<1xf32>
    %96 = vector.shape_cast %95 : vector<1xf32> to vector<1x1xf32>
    %cst_33 = arith.constant 3.200000e+01 : f32
    %97 = vector.broadcast %cst_33 : f32 to vector<1x1xf32>
    %98 = arith.divf %96, %97 : vector<1x1xf32>
    %99 = vector.broadcast %98 : vector<1x1xf32> to vector<32x128xf32>
    %100 = arith.subf %88, %99 : vector<32x128xf32>
    %101 = arith.mulf %100, %100 : vector<32x128xf32>
    %cst_34 = arith.constant dense<0.000000e+00> : vector<32xf32>
    %102 = vector.multi_reduction <add>, %101, %cst_34 [1] : vector<32x128xf32> to vector<32xf32>
    %103 = vector.shape_cast %102 : vector<32xf32> to vector<32x1xf32>
    %cst_35 = arith.constant 1.280000e+02 : f32
    %104 = vector.broadcast %cst_35 : f32 to vector<32x1xf32>
    %105 = arith.divf %103, %104 : vector<32x1xf32>
    %cst_36 = arith.constant dense<0.000000e+00> : vector<1xf32>
    %106 = vector.multi_reduction <add>, %105, %cst_36 [0] : vector<32x1xf32> to vector<1xf32>
    %107 = vector.shape_cast %106 : vector<1xf32> to vector<1x1xf32>
    %cst_37 = arith.constant 3.200000e+01 : f32
    %108 = vector.broadcast %cst_37 : f32 to vector<1x1xf32>
    %109 = arith.divf %107, %108 : vector<1x1xf32>
    %cst_38 = arith.constant 9.99999993E-9 : f32
    %110 = vector.broadcast %cst_38 : f32 to vector<1x1xf32>
    %111 = arith.addf %109, %110 : vector<1x1xf32>
    %112 = math.rsqrt %111 : vector<1x1xf32>
    %113 = vector.broadcast %112 : vector<1x1xf32> to vector<32x1xf32>
    %114 = arith.mulf %89, %113 : vector<32x1xf32>
    %115 = vector.broadcast %114 : vector<32x1xf32> to vector<32x128xf32>
    %116 = arith.mulf %100, %115 : vector<32x128xf32>
    %117 = vector.broadcast %90 : vector<32x1xf32> to vector<32x128xf32>
    %118 = arith.addf %116, %117 : vector<32x128xf32>
    %c0_39 = arith.constant 0 : index
    %c0_40 = arith.constant 0 : index
    %c0_41 = arith.constant 0 : index
    %c0_42 = arith.constant 0 : index
    %119 = vector.load %arg6[%c0_39, %c0_40, %c0_41, %c0_42] : memref<1x2x16x32xbf16, #tpu.memory_space<vmem>>, vector<1x1x16x32xbf16>
    %120 = vector.shape_cast %119 : vector<1x1x16x32xbf16> to vector<16x32xbf16>
    %121 = arith.truncf %118 : vector<32x128xf32> to vector<32x128xbf16>
    %cst_43 = arith.constant dense<0.000000e+00> : vector<16x128xf32>
    %122 = tpu.matmul %120, %121, %cst_43 {dimension_numbers = #tpu.dot_dimension_numbers<[1], [0], [0], [1], [0, 0, 1, 1], [], []>} : vector<16x32xbf16>, vector<32x128xbf16>, vector<16x128xf32> -> vector<16x128xf32>
    %123 = arith.addf %4, %122 : vector<16x128xf32>
    %124 = vector.extract_strided_slice %6 {offsets = [0, 9], sizes = [16, 1], strides = [1, 1]} : vector<32x24xf32> to vector<16x1xf32>
    %125 = vector.broadcast %124 : vector<16x1xf32> to vector<16x128xf32>
    %126 = arith.addf %123, %125 : vector<16x128xf32>
    %c0_44 = arith.constant 0 : index
    %c1 = arith.constant 1 : index
    %c0_45 = arith.constant 0 : index
    %c0_46 = arith.constant 0 : index
    %127 = vector.load %arg5[%c0_44, %c1, %c0_45, %c0_46] : memref<1x2x32x16xbf16, #tpu.memory_space<vmem>>, vector<1x1x32x16xbf16>
    %128 = vector.shape_cast %127 : vector<1x1x32x16xbf16> to vector<32x16xbf16>
    %129 = arith.truncf %126 : vector<16x128xf32> to vector<16x128xbf16>
    %cst_47 = arith.constant dense<0.000000e+00> : vector<32x128xf32>
    %130 = tpu.matmul %128, %129, %cst_47 {dimension_numbers = #tpu.dot_dimension_numbers<[1], [0], [0], [1], [0, 0, 1, 1], [], []>} : vector<32x16xbf16>, vector<16x128xbf16>, vector<32x128xf32> -> vector<32x128xf32>
    %131 = vector.extract_strided_slice %6 {offsets = [0, 12], sizes = [32, 1], strides = [1, 1]} : vector<32x24xf32> to vector<32x1xf32>
    %132 = vector.broadcast %131 : vector<32x1xf32> to vector<32x128xf32>
    %133 = arith.addf %130, %132 : vector<32x128xf32>
    %cst_48 = arith.constant 0.000000e+00 : f32
    %134 = vector.broadcast %cst_48 : f32 to vector<32x128xf32>
    %135 = arith.cmpf oge, %133, %134 : vector<32x128xf32>
    %136 = vector.extract_strided_slice %6 {offsets = [0, 22], sizes = [32, 1], strides = [1, 1]} : vector<32x24xf32> to vector<32x1xf32>
    %137 = vector.broadcast %136 : vector<32x1xf32> to vector<32x128xf32>
    %138 = arith.mulf %137, %133 : vector<32x128xf32>
    %139 = arith.select %135, %133, %138 : vector<32x128xi1>, vector<32x128xf32>
    %140 = vector.extract_strided_slice %6 {offsets = [0, 13], sizes = [32, 1], strides = [1, 1]} : vector<32x24xf32> to vector<32x1xf32>
    %141 = vector.extract_strided_slice %6 {offsets = [0, 14], sizes = [32, 1], strides = [1, 1]} : vector<32x24xf32> to vector<32x1xf32>
    %cst_49 = arith.constant dense<0.000000e+00> : vector<32xf32>
    %142 = vector.multi_reduction <add>, %139, %cst_49 [1] : vector<32x128xf32> to vector<32xf32>
    %143 = vector.shape_cast %142 : vector<32xf32> to vector<32x1xf32>
    %cst_50 = arith.constant 1.280000e+02 : f32
    %144 = vector.broadcast %cst_50 : f32 to vector<32x1xf32>
    %145 = arith.divf %143, %144 : vector<32x1xf32>
    %cst_51 = arith.constant dense<0.000000e+00> : vector<1xf32>
    %146 = vector.multi_reduction <add>, %145, %cst_51 [0] : vector<32x1xf32> to vector<1xf32>
    %147 = vector.shape_cast %146 : vector<1xf32> to vector<1x1xf32>
    %cst_52 = arith.constant 3.200000e+01 : f32
    %148 = vector.broadcast %cst_52 : f32 to vector<1x1xf32>
    %149 = arith.divf %147, %148 : vector<1x1xf32>
    %150 = vector.broadcast %149 : vector<1x1xf32> to vector<32x128xf32>
    %151 = arith.subf %139, %150 : vector<32x128xf32>
    %152 = arith.mulf %151, %151 : vector<32x128xf32>
    %cst_53 = arith.constant dense<0.000000e+00> : vector<32xf32>
    %153 = vector.multi_reduction <add>, %152, %cst_53 [1] : vector<32x128xf32> to vector<32xf32>
    %154 = vector.shape_cast %153 : vector<32xf32> to vector<32x1xf32>
    %cst_54 = arith.constant 1.280000e+02 : f32
    %155 = vector.broadcast %cst_54 : f32 to vector<32x1xf32>
    %156 = arith.divf %154, %155 : vector<32x1xf32>
    %cst_55 = arith.constant dense<0.000000e+00> : vector<1xf32>
    %157 = vector.multi_reduction <add>, %156, %cst_55 [0] : vector<32x1xf32> to vector<1xf32>
    %158 = vector.shape_cast %157 : vector<1xf32> to vector<1x1xf32>
    %cst_56 = arith.constant 3.200000e+01 : f32
    %159 = vector.broadcast %cst_56 : f32 to vector<1x1xf32>
    %160 = arith.divf %158, %159 : vector<1x1xf32>
    %cst_57 = arith.constant 9.99999993E-9 : f32
    %161 = vector.broadcast %cst_57 : f32 to vector<1x1xf32>
    %162 = arith.addf %160, %161 : vector<1x1xf32>
    %163 = math.rsqrt %162 : vector<1x1xf32>
    %164 = vector.broadcast %163 : vector<1x1xf32> to vector<32x1xf32>
    %165 = arith.mulf %140, %164 : vector<32x1xf32>
    %166 = vector.broadcast %165 : vector<32x1xf32> to vector<32x128xf32>
    %167 = arith.mulf %151, %166 : vector<32x128xf32>
    %168 = vector.broadcast %141 : vector<32x1xf32> to vector<32x128xf32>
    %169 = arith.addf %167, %168 : vector<32x128xf32>
    %c2_i32 = arith.constant 2 : i32
    %170 = vector.broadcast %c2_i32 : i32 to vector<1x128xi32>
    %171 = arith.cmpi sge, %9, %170 : vector<1x128xi32>
    %c2_i32_58 = arith.constant 2 : i32
    %172 = tpu.dynamic_rotate %169 by %c2_i32_58 dim 1 : vector<32x128xf32>, i32 -> vector<32x128xf32>
    %cst_59 = arith.constant 0.000000e+00 : f32
    %173 = vector.shape_cast %171 : vector<1x128xi1> to vector<1x128xi1>
    %174 = vector.broadcast %173 : vector<1x128xi1> to vector<32x128xi1>
    %175 = vector.broadcast %cst_59 : f32 to vector<32x128xf32>
    %176 = arith.select %174, %172, %175 : vector<32x128xi1>, vector<32x128xf32>
    %c126_i32 = arith.constant 126 : i32
    %177 = vector.broadcast %c126_i32 : i32 to vector<1x128xi32>
    %178 = arith.cmpi slt, %9, %177 : vector<1x128xi32>
    %c126_i32_60 = arith.constant 126 : i32
    %179 = tpu.dynamic_rotate %169 by %c126_i32_60 dim 1 : vector<32x128xf32>, i32 -> vector<32x128xf32>
    %cst_61 = arith.constant 0.000000e+00 : f32
    %180 = vector.shape_cast %178 : vector<1x128xi1> to vector<1x128xi1>
    %181 = vector.broadcast %180 : vector<1x128xi1> to vector<32x128xi1>
    %182 = vector.broadcast %cst_61 : f32 to vector<32x128xf32>
    %183 = arith.select %181, %179, %182 : vector<32x128xi1>, vector<32x128xf32>
    %184 = vector.extract_strided_slice %6 {offsets = [0, 15], sizes = [32, 1], strides = [1, 1]} : vector<32x24xf32> to vector<32x1xf32>
    %185 = vector.broadcast %184 : vector<32x1xf32> to vector<32x128xf32>
    %186 = arith.mulf %185, %176 : vector<32x128xf32>
    %187 = vector.extract_strided_slice %6 {offsets = [0, 16], sizes = [32, 1], strides = [1, 1]} : vector<32x24xf32> to vector<32x1xf32>
    %188 = vector.broadcast %187 : vector<32x1xf32> to vector<32x128xf32>
    %189 = arith.mulf %188, %169 : vector<32x128xf32>
    %190 = arith.addf %186, %189 : vector<32x128xf32>
    %191 = vector.extract_strided_slice %6 {offsets = [0, 17], sizes = [32, 1], strides = [1, 1]} : vector<32x24xf32> to vector<32x1xf32>
    %192 = vector.broadcast %191 : vector<32x1xf32> to vector<32x128xf32>
    %193 = arith.mulf %192, %183 : vector<32x128xf32>
    %194 = arith.addf %190, %193 : vector<32x128xf32>
    %195 = vector.extract_strided_slice %6 {offsets = [0, 18], sizes = [32, 1], strides = [1, 1]} : vector<32x24xf32> to vector<32x1xf32>
    %196 = vector.broadcast %195 : vector<32x1xf32> to vector<32x128xf32>
    %197 = arith.addf %194, %196 : vector<32x128xf32>
    %cst_62 = arith.constant 0.000000e+00 : f32
    %198 = vector.broadcast %cst_62 : f32 to vector<32x128xf32>
    %199 = arith.cmpf oge, %197, %198 : vector<32x128xf32>
    %200 = vector.extract_strided_slice %6 {offsets = [0, 23], sizes = [32, 1], strides = [1, 1]} : vector<32x24xf32> to vector<32x1xf32>
    %201 = vector.broadcast %200 : vector<32x1xf32> to vector<32x128xf32>
    %202 = arith.mulf %201, %197 : vector<32x128xf32>
    %203 = arith.select %199, %197, %202 : vector<32x128xi1>, vector<32x128xf32>
    %204 = vector.extract_strided_slice %6 {offsets = [0, 19], sizes = [32, 1], strides = [1, 1]} : vector<32x24xf32> to vector<32x1xf32>
    %205 = vector.extract_strided_slice %6 {offsets = [0, 20], sizes = [32, 1], strides = [1, 1]} : vector<32x24xf32> to vector<32x1xf32>
    %cst_63 = arith.constant dense<0.000000e+00> : vector<32xf32>
    %206 = vector.multi_reduction <add>, %203, %cst_63 [1] : vector<32x128xf32> to vector<32xf32>
    %207 = vector.shape_cast %206 : vector<32xf32> to vector<32x1xf32>
    %cst_64 = arith.constant 1.280000e+02 : f32
    %208 = vector.broadcast %cst_64 : f32 to vector<32x1xf32>
    %209 = arith.divf %207, %208 : vector<32x1xf32>
    %cst_65 = arith.constant dense<0.000000e+00> : vector<1xf32>
    %210 = vector.multi_reduction <add>, %209, %cst_65 [0] : vector<32x1xf32> to vector<1xf32>
    %211 = vector.shape_cast %210 : vector<1xf32> to vector<1x1xf32>
    %cst_66 = arith.constant 3.200000e+01 : f32
    %212 = vector.broadcast %cst_66 : f32 to vector<1x1xf32>
    %213 = arith.divf %211, %212 : vector<1x1xf32>
    %214 = vector.broadcast %213 : vector<1x1xf32> to vector<32x128xf32>
    %215 = arith.subf %203, %214 : vector<32x128xf32>
    %216 = arith.mulf %215, %215 : vector<32x128xf32>
    %cst_67 = arith.constant dense<0.000000e+00> : vector<32xf32>
    %217 = vector.multi_reduction <add>, %216, %cst_67 [1] : vector<32x128xf32> to vector<32xf32>
    %218 = vector.shape_cast %217 : vector<32xf32> to vector<32x1xf32>
    %cst_68 = arith.constant 1.280000e+02 : f32
    %219 = vector.broadcast %cst_68 : f32 to vector<32x1xf32>
    %220 = arith.divf %218, %219 : vector<32x1xf32>
    %cst_69 = arith.constant dense<0.000000e+00> : vector<1xf32>
    %221 = vector.multi_reduction <add>, %220, %cst_69 [0] : vector<32x1xf32> to vector<1xf32>
    %222 = vector.shape_cast %221 : vector<1xf32> to vector<1x1xf32>
    %cst_70 = arith.constant 3.200000e+01 : f32
    %223 = vector.broadcast %cst_70 : f32 to vector<1x1xf32>
    %224 = arith.divf %222, %223 : vector<1x1xf32>
    %cst_71 = arith.constant 9.99999993E-9 : f32
    %225 = vector.broadcast %cst_71 : f32 to vector<1x1xf32>
    %226 = arith.addf %224, %225 : vector<1x1xf32>
    %227 = math.rsqrt %226 : vector<1x1xf32>
    %228 = vector.broadcast %227 : vector<1x1xf32> to vector<32x1xf32>
    %229 = arith.mulf %204, %228 : vector<32x1xf32>
    %230 = vector.broadcast %229 : vector<32x1xf32> to vector<32x128xf32>
    %231 = arith.mulf %215, %230 : vector<32x128xf32>
    %232 = vector.broadcast %205 : vector<32x1xf32> to vector<32x128xf32>
    %233 = arith.addf %231, %232 : vector<32x128xf32>
    %c0_72 = arith.constant 0 : index
    %c1_73 = arith.constant 1 : index
    %c0_74 = arith.constant 0 : index
    %c0_75 = arith.constant 0 : index
    %234 = vector.load %arg6[%c0_72, %c1_73, %c0_74, %c0_75] : memref<1x2x16x32xbf16, #tpu.memory_space<vmem>>, vector<1x1x16x32xbf16>
    %235 = vector.shape_cast %234 : vector<1x1x16x32xbf16> to vector<16x32xbf16>
    %236 = arith.truncf %233 : vector<32x128xf32> to vector<32x128xbf16>
    %cst_76 = arith.constant dense<0.000000e+00> : vector<16x128xf32>
    %237 = tpu.matmul %235, %236, %cst_76 {dimension_numbers = #tpu.dot_dimension_numbers<[1], [0], [0], [1], [0, 0, 1, 1], [], []>} : vector<16x32xbf16>, vector<32x128xbf16>, vector<16x128xf32> -> vector<16x128xf32>
    %238 = arith.addf %126, %237 : vector<16x128xf32>
    %239 = vector.extract_strided_slice %6 {offsets = [0, 21], sizes = [16, 1], strides = [1, 1]} : vector<32x24xf32> to vector<16x1xf32>
    %240 = vector.broadcast %239 : vector<16x1xf32> to vector<16x128xf32>
    %241 = arith.addf %238, %240 : vector<16x128xf32>
    %c0_77 = arith.constant 0 : index
    %c0_78 = arith.constant 0 : index
    %242 = vector.load %arg10[%c0_77, %c0_78] : memref<16x128xf32, #tpu.memory_space<vmem>>, vector<16x128xf32>
    tpu.vector_store %arg10[%c0_77, %c0_78], %241 {strides = array<i32>} : memref<16x128xf32, #tpu.memory_space<vmem>>, vector<16x128xf32>,
    %c1_i32_79 = arith.constant 1 : i32
    %243 = arith.cmpi eq, %arg1, %c1_i32_79 : i32
    %244 = arith.extui %243 : i1 to i32
    %c0_i32_80 = arith.constant 0 : i32
    %245 = arith.cmpi ne, %244, %c0_i32_80 : i32
    scf.if %245 {
      %c0_81 = arith.constant 0 : index
      %c0_82 = arith.constant 0 : index
      %c0_83 = arith.constant 0 : index
      %246 = vector.load %arg2[%c0_81, %c0_82, %c0_83] : memref<1x16x128xf32, #tpu.memory_space<vmem>>, vector<1x16x128xf32>
      %247 = vector.shape_cast %246 : vector<1x16x128xf32> to vector<16x128xf32>
      %c1_84 = arith.constant 1 : index
      %c0_85 = arith.constant 0 : index
      %c0_86 = arith.constant 0 : index
      %248 = vector.load %arg4[%c1_84, %c0_85, %c0_86] : memref<2x16x16xbf16, #tpu.memory_space<vmem>>, vector<1x16x16xbf16>
      %249 = vector.shape_cast %248 : vector<1x16x16xbf16> to vector<16x16xbf16>
      %250 = arith.truncf %241 : vector<16x128xf32> to vector<16x128xbf16>
      %cst_87 = arith.constant dense<0.000000e+00> : vector<16x128xf32>
      %251 = tpu.matmul %249, %250, %cst_87 {dimension_numbers = #tpu.dot_dimension_numbers<[1], [0], [0], [1], [0, 0, 1, 1], [], []>} : vector<16x16xbf16>, vector<16x128xbf16>, vector<16x128xf32> -> vector<16x128xf32>
      %252 = vector.extract_strided_slice %0 {offsets = [0, 3], sizes = [16, 1], strides = [1, 1]} : vector<32x4xf32> to vector<16x1xf32>
      %253 = vector.broadcast %252 : vector<16x1xf32> to vector<16x128xf32>
      %254 = arith.addf %251, %253 : vector<16x128xf32>
      %cst_88 = arith.constant 0.000000e+00 : f32
      %255 = vector.broadcast %cst_88 : f32 to vector<16x128xf32>
      %256 = arith.maximumf %254, %255 : vector<16x128xf32>
      %257 = arith.mulf %247, %256 : vector<16x128xf32>
      %c0_89 = arith.constant 0 : index
      %c0_90 = arith.constant 0 : index
      %c0_91 = arith.constant 0 : index
      %258 = vector.load %arg9[%c0_89, %c0_90, %c0_91] : memref<1x16x128xf32, #tpu.memory_space<vmem>>, vector<1x16x128xf32>
      %259 = vector.shape_cast %258 : vector<1x16x128xf32> to vector<16x128xf32>
      %260 = vector.shape_cast %257 : vector<16x128xf32> to vector<1x16x128xf32>
      tpu.vector_store %arg9[%c0_89, %c0_90, %c0_91], %260 {strides = array<i32>} : memref<1x16x128xf32, #tpu.memory_space<vmem>>, vector<1x16x128xf32>,
    } else {
    }
    return
  }
  func.func @transform_0(%arg0: i32, %arg1: i32) -> (i32, i32, i32) {
    %c0_i32 = arith.constant 0 : i32
    %c0_i32_0 = arith.constant 0 : i32
    %c0_i32_1 = arith.constant 0 : i32
    return %arg0, %c0_i32, %c0_i32_0 : i32, i32, i32
  }
  func.func @transform_1(%arg0: i32, %arg1: i32) -> (i32, i32) {
    %c0_i32 = arith.constant 0 : i32
    %c0_i32_0 = arith.constant 0 : i32
    %c0_i32_1 = arith.constant 0 : i32
    return %c0_i32, %c0_i32_0 : i32, i32
  }
  func.func @transform_2(%arg0: i32, %arg1: i32) -> (i32, i32, i32) {
    %c0_i32 = arith.constant 0 : i32
    %c0_i32_0 = arith.constant 0 : i32
    %c0_i32_1 = arith.constant 0 : i32
    %c0_i32_2 = arith.constant 0 : i32
    return %c0_i32, %c0_i32_0, %c0_i32_1 : i32, i32, i32
  }
  func.func @transform_3(%arg0: i32, %arg1: i32) -> (i32, i32, i32, i32) {
    %c0_i32 = arith.constant 0 : i32
    %c0_i32_0 = arith.constant 0 : i32
    %c0_i32_1 = arith.constant 0 : i32
    %c0_i32_2 = arith.constant 0 : i32
    return %arg1, %c0_i32, %c0_i32_0, %c0_i32_1 : i32, i32, i32, i32
  }
  func.func @transform_4(%arg0: i32, %arg1: i32) -> (i32, i32, i32, i32) {
    %c0_i32 = arith.constant 0 : i32
    %c0_i32_0 = arith.constant 0 : i32
    %c0_i32_1 = arith.constant 0 : i32
    %c0_i32_2 = arith.constant 0 : i32
    return %arg1, %c0_i32, %c0_i32_0, %c0_i32_1 : i32, i32, i32, i32
  }
  func.func @transform_5(%arg0: i32, %arg1: i32) -> (i32, i32, i32) {
    %c0_i32 = arith.constant 0 : i32
    %c0_i32_0 = arith.constant 0 : i32
    %c0_i32_1 = arith.constant 0 : i32
    return %arg1, %c0_i32, %c0_i32_0 : i32, i32, i32
  }
  func.func @transform_6(%arg0: i32, %arg1: i32) -> (i32, i32, i32, i32) {
    %c0_i32 = arith.constant 0 : i32
    %c0_i32_0 = arith.constant 0 : i32
    %c0_i32_1 = arith.constant 0 : i32
    return %arg0, %arg1, %c0_i32, %c0_i32_0 : i32, i32, i32, i32
  }
  func.func @transform_7(%arg0: i32, %arg1: i32) -> (i32, i32, i32) {
    %c0_i32 = arith.constant 0 : i32
    %c0_i32_0 = arith.constant 0 : i32
    %c0_i32_1 = arith.constant 0 : i32
    return %arg0, %c0_i32, %c0_i32_0 : i32, i32, i32
  }
}

</mosaic_0001>

<llo_original>
// kernel: tpu_custom_call.1
$region0: #{tpu_custom_call.1}
  #allocation0 [shape = 'u32[]', space=smem, size = 0x4, offset = 0x4, fixed_abs, tag = 'smem constant byte address 0x4 - core index']
  #allocation1 [shape = 'u32[144,128]{1,0:T(1,128)}', space=vmem, size = 0x12000, scoped, tag = 'internal scratch']
  #allocation2 [shape = 'f32[16,128]{1,0:T(8,128)}', space=vmem, size = 0x2000, scoped, tag = 'scratch operand']
  %s0 = inlined_call_operand.vmem [shape: f32[2,16,128], index: 0, kind: input, shape index: {}]
  %s1 = inlined_call_operand.vmem [shape: f32[32,4], index: 1, kind: input, shape index: {}]
  %s2 = inlined_call_operand.vmem [shape: bf16[2,16,16], index: 2, kind: input, shape index: {}]
  %s3 = inlined_call_operand.vmem [shape: bf16[2,2,32,16], index: 3, kind: input, shape index: {}]
  %s4 = inlined_call_operand.vmem [shape: bf16[2,2,16,32], index: 4, kind: input, shape index: {}]
  %s5 = inlined_call_operand.vmem [shape: f32[2,32,24], index: 5, kind: input, shape index: {}]
  %s6 = inlined_call_operand.vmem [shape: f32[2,2,32,1], index: 6, kind: input, shape index: {}]
  %s7 = inlined_call_operand.hbm [shape: f32[2,16,128], index: 7, kind: output, shape index: {}]
  %s8 = sld [smem:[#allocation0]]
  $region69: #{tpu_custom_call.1} parent=0
    _
  %s10 = ssub.s32 1, %s8
  %s11 = scalar_select 0, %s10, %s8
  $region1: #{tpu_custom_call.1} parent=0
    #allocation3 [shape = 'u8[16384]{0}', space=vmem, size = 0x4000, scoped, tag = 'output window, operand 0']
    #allocation4 [shape = 's32[2]{0}', space=sflag, size = 0x8, scoped, tag = 'scoped memory for tpu_custom_call.1']
    %12 = vsyncpa [#allocation4], 0
    %s13 = scalar_lea.sflag [#allocation4], 1
    %14 = vsyncpa %s13, 0
    loop: start=0, step=1, limit=6
    $region2: #{tpu_custom_call.1} parent=1 // loop_pre_header
      _
    $region3: #{tpu_custom_call.1} parent=1 // loop_header
      %s16 = sphi 0, %s20
      %p17 = scmp.ge.s32.totalorder %s16, 6
      %s23 = sphi 0, %s35
      %s24 = sphi 0, %s31
      %s25 = sphi 0, %s23
      %s26 = sphi 0, %s24
      %s27 = sphi 0, %s25
      %s28 = sphi 0, %s26
      %s38 = sphi 0, %s40
      %s41 = sphi 0, %s38
      %s42 = sphi 0, %s41
      %s58 = sphi 0, %s42
      %s62 = sphi 0, %s62
      %s64 = sphi 0, %s62
      %s65 = sphi 0, %s64
      %s79 = sphi 0, %s65
      %s83 = sphi 0, %s83
      %s85 = sphi 0, %s83
      %s86 = sphi 0, %s85
      %s100 = sphi 0, %s86
      %s106 = sphi 0, %s108
      %s109 = sphi 0, %s106
      %s110 = sphi 0, %s109
      %s126 = sphi 0, %s110
      %s132 = sphi 0, %s134
      %s135 = sphi 0, %s132
      %s136 = sphi 0, %s135
      %s152 = sphi 0, %s136
      %s158 = sphi 0, %s160
      %s161 = sphi 0, %s158
      %s162 = sphi 0, %s161
      %s178 = sphi 0, %s162
      %s186 = sphi 0, %s188
      %s189 = sphi 0, %s186
      %s190 = sphi 0, %s189
      %s206 = sphi 0, %s190
      %s212 = sphi 0, %s214
      %s215 = sphi 0, %s212
      %s216 = sphi 0, %s215
      %s232 = sphi 0, %s216
    $region4: #{tpu_custom_call.1} parent=1 // loop_header_branch
      %19 = sbr.rel (%p17) target = $region8
    $region5: #{tpu_custom_call.1} parent=1 // loop_body
      %s21 = ssub.s32 %s16, 1
      %s22 = ssub.s32 %s16, 2
      %s29 = sadd.s32 1, %s24
      %p30 = scmp.ge.s32.totalorder %s29, 2
      %s31 = scalar_select %p30, 0, %s29
      %s32 = sadd.s32 1, %s23
      %s33 = scalar_select %p30, %s32, %s23
      %p34 = scmp.ge.s32.totalorder %s33, 2
      %s35 = scalar_select %p34, 0, %s33
      %s36 = ssub.s32 %s23, %s35
      %p37 = scmp.eq.s32.totalorder %s36, 0
      %s39 = sadd.s32 %s38, 1
      %s40 = scalar_select %p37, %s38, %s39
      %p43 = pneg %p37
      %p44 = scmp.eq.s32.totalorder %s16, 3
      %p45 = por %p43, %p44
      %p46 = scmp.ne.s32.totalorder %s38, %s41
      %p47 = scmp.eq.s32.totalorder %s16, 0
      %p48 = por %p46, %p47
      %p49 = scmp.ne.s32.totalorder %s38, %s41
      %p50 = scmp.eq.s32.totalorder %s21, 3
      %p51 = por %p49, %p50
      %p52 = scmp.ne.s32.totalorder %s41, %s42
      %p53 = scmp.eq.s32.totalorder %s21, 0
      %p54 = por %p52, %p53
      %p55 = scmp.ne.s32.totalorder %s41, %s42
      %p56 = scmp.eq.s32.totalorder %s22, 3
      %p57 = por %p55, %p56
      %p59 = scmp.ne.s32.totalorder %s42, %s58
      %p60 = scmp.eq.s32.totalorder %s22, 0
      %p61 = por %p59, %p60
      %s63 = sadd.s32 %s62, 1
      %p66 = scmp.eq.s32.totalorder %s16, 3
      %p67 = scmp.ne.s32.totalorder %s62, %s64
      %p68 = scmp.eq.s32.totalorder %s16, 0
      %p69 = por %p67, %p68
      %p70 = scmp.ne.s32.totalorder %s62, %s64
      %p71 = scmp.eq.s32.totalorder %s21, 3
      %p72 = por %p70, %p71
      %p73 = scmp.ne.s32.totalorder %s64, %s65
      %p74 = scmp.eq.s32.totalorder %s21, 0
      %p75 = por %p73, %p74
      %p76 = scmp.ne.s32.totalorder %s64, %s65
      %p77 = scmp.eq.s32.totalorder %s22, 3
      %p78 = por %p76, %p77
      %p80 = scmp.ne.s32.totalorder %s65, %s79
      %p81 = scmp.eq.s32.totalorder %s22, 0
      %p82 = por %p80, %p81
      %s84 = sadd.s32 %s83, 1
      %p87 = scmp.eq.s32.totalorder %s16, 3
      %p88 = scmp.ne.s32.totalorder %s83, %s85
      %p89 = scmp.eq.s32.totalorder %s16, 0
      %p90 = por %p88, %p89
      %p91 = scmp.ne.s32.totalorder %s83, %s85
      %p92 = scmp.eq.s32.totalorder %s21, 3
      %p93 = por %p91, %p92
      %p94 = scmp.ne.s32.totalorder %s85, %s86
      %p95 = scmp.eq.s32.totalorder %s21, 0
      %p96 = por %p94, %p95
      %p97 = scmp.ne.s32.totalorder %s85, %s86
      %p98 = scmp.eq.s32.totalorder %s22, 3
      %p99 = por %p97, %p98
      %p101 = scmp.ne.s32.totalorder %s86, %s100
      %p102 = scmp.eq.s32.totalorder %s22, 0
      %p103 = por %p101, %p102
      %s104 = ssub.s32 %s24, %s31
      %p105 = scmp.eq.s32.totalorder %s104, 0
      %s107 = sadd.s32 %s106, 1
      %s108 = scalar_select %p105, %s106, %s107
      %p111 = pneg %p105
      %p112 = scmp.eq.s32.totalorder %s16, 3
      %p113 = por %p111, %p112
      %p114 = scmp.ne.s32.totalorder %s106, %s109
      %p115 = scmp.eq.s32.totalorder %s16, 0
      %p116 = por %p114, %p115
      %p117 = scmp.ne.s32.totalorder %s106, %s109
      %p118 = scmp.eq.s32.totalorder %s21, 3
      %p119 = por %p117, %p118
      %p120 = scmp.ne.s32.totalorder %s109, %s110
      %p121 = scmp.eq.s32.totalorder %s21, 0
      %p122 = por %p120, %p121
      %p123 = scmp.ne.s32.totalorder %s109, %s110
      %p124 = scmp.eq.s32.totalorder %s22, 3
      %p125 = por %p123, %p124
      %p127 = scmp.ne.s32.totalorder %s110, %s126
      %p128 = scmp.eq.s32.totalorder %s22, 0
      %p129 = por %p127, %p128
      %s130 = ssub.s32 %s24, %s31
      %p131 = scmp.eq.s32.totalorder %s130, 0
      %s133 = sadd.s32 %s132, 1
      %s134 = scalar_select %p131, %s132, %s133
      %p137 = pneg %p131
      %p138 = scmp.eq.s32.totalorder %s16, 3
      %p139 = por %p137, %p138
      %p140 = scmp.ne.s32.totalorder %s132, %s135
      %p141 = scmp.eq.s32.totalorder %s16, 0
      %p142 = por %p140, %p141
      %p143 = scmp.ne.s32.totalorder %s132, %s135
      %p144 = scmp.eq.s32.totalorder %s21, 3
      %p145 = por %p143, %p144
      %p146 = scmp.ne.s32.totalorder %s135, %s136
      %p147 = scmp.eq.s32.totalorder %s21, 0
      %p148 = por %p146, %p147
      %p149 = scmp.ne.s32.totalorder %s135, %s136
      %p150 = scmp.eq.s32.totalorder %s22, 3
      %p151 = por %p149, %p150
      %p153 = scmp.ne.s32.totalorder %s136, %s152
      %p154 = scmp.eq.s32.totalorder %s22, 0
      %p155 = por %p153, %p154
      %s156 = ssub.s32 %s24, %s31
      %p157 = scmp.eq.s32.totalorder %s156, 0
      %s159 = sadd.s32 %s158, 1
      %s160 = scalar_select %p157, %s158, %s159
      %p163 = pneg %p157
      %p164 = scmp.eq.s32.totalorder %s16, 3
      %p165 = por %p163, %p164
      %p166 = scmp.ne.s32.totalorder %s158, %s161
      %p167 = scmp.eq.s32.totalorder %s16, 0
      %p168 = por %p166, %p167
      %p169 = scmp.ne.s32.totalorder %s158, %s161
      %p170 = scmp.eq.s32.totalorder %s21, 3
      %p171 = por %p169, %p170
      %p172 = scmp.ne.s32.totalorder %s161, %s162
      %p173 = scmp.eq.s32.totalorder %s21, 0
      %p174 = por %p172, %p173
      %p175 = scmp.ne.s32.totalorder %s161, %s162
      %p176 = scmp.eq.s32.totalorder %s22, 3
      %p177 = por %p175, %p176
      %p179 = scmp.ne.s32.totalorder %s162, %s178
      %p180 = scmp.eq.s32.totalorder %s22, 0
      %p181 = por %p179, %p180
      %s182 = ssub.s32 %s23, %s35
      %s183 = ssub.s32 %s24, %s31
      %s184 = sor.u32 %s182, %s183
      %p185 = scmp.eq.s32.totalorder %s184, 0
      %s187 = sadd.s32 %s186, 1
      %s188 = scalar_select %p185, %s186, %s187
      %p191 = pneg %p185
      %p192 = scmp.eq.s32.totalorder %s16, 3
      %p193 = por %p191, %p192
      %p194 = scmp.ne.s32.totalorder %s186, %s189
      %p195 = scmp.eq.s32.totalorder %s16, 0
      %p196 = por %p194, %p195
      %p197 = scmp.ne.s32.totalorder %s186, %s189
      %p198 = scmp.eq.s32.totalorder %s21, 3
      %p199 = por %p197, %p198
      %p200 = scmp.ne.s32.totalorder %s189, %s190
      %p201 = scmp.eq.s32.totalorder %s21, 0
      %p202 = por %p200, %p201
      %p203 = scmp.ne.s32.totalorder %s189, %s190
      %p204 = scmp.eq.s32.totalorder %s22, 3
      %p205 = por %p203, %p204
      %p207 = scmp.ne.s32.totalorder %s190, %s206
      %p208 = scmp.eq.s32.totalorder %s22, 0
      %p209 = por %p207, %p208
      %s210 = ssub.s32 %s23, %s35
      %p211 = scmp.eq.s32.totalorder %s210, 0
      %s213 = sadd.s32 %s212, 1
      %s214 = scalar_select %p211, %s212, %s213
      %p217 = pneg %p211
      %p218 = scmp.eq.s32.totalorder %s16, 3
      %p219 = por %p217, %p218
      %p220 = scmp.ne.s32.totalorder %s212, %s215
      %p221 = scmp.eq.s32.totalorder %s16, 0
      %p222 = por %p220, %p221
      %p223 = scmp.ne.s32.totalorder %s212, %s215
      %p224 = scmp.eq.s32.totalorder %s21, 3
      %p225 = por %p223, %p224
      %p226 = scmp.ne.s32.totalorder %s215, %s216
      %p227 = scmp.eq.s32.totalorder %s21, 0
      %p228 = por %p226, %p227
      %p229 = scmp.ne.s32.totalorder %s215, %s216
      %p230 = scmp.eq.s32.totalorder %s22, 3
      %p231 = por %p229, %p230
      %p233 = scmp.ne.s32.totalorder %s216, %s232
      %p234 = scmp.eq.s32.totalorder %s22, 0
      %p235 = por %p233, %p234
      %p236 = scmp.le.s32.totalorder 1, %s16
      %p237 = scmp.lt.s32.totalorder %s16, 5
      %p238 = pnand %p236, %p237
      %p239 = pneg %p238
      // Predicated region
      $region9: #{tpu_custom_call.1} parent=5 // pred_check
        _
      $region10: #{tpu_custom_call.1} parent=5 // pred_check_branch
        %241 = sbr.rel (%p238) target = $region12
      $region11: #{tpu_custom_call.1} parent=5 // pred_region
        %s242 = ssub.s32 %s16, 1
        // Predicated region
        $region13: #{tpu_custom_call.1} parent=11 // pred_check
          %p243 = pneg %p75
        $region14: #{tpu_custom_call.1} parent=11 // pred_check_branch
          %245 = sbr.rel (%p243) target = $region16
        $region15: #{tpu_custom_call.1} parent=11 // pred_region
          _
        $region16: #{tpu_custom_call.1} parent=11 // pred_fallthru
          _
        // Predicated region
        $region17: #{tpu_custom_call.1} parent=11 // pred_check
          %p246 = pneg %p96
        $region18: #{tpu_custom_call.1} parent=11 // pred_check_branch
          %248 = sbr.rel (%p246) target = $region20
        $region19: #{tpu_custom_call.1} parent=11 // pred_region
          _
        $region20: #{tpu_custom_call.1} parent=11 // pred_fallthru
          _
      $region12: #{tpu_custom_call.1} parent=5 // pred_fallthru
        _
      %p249 = scmp.lt.s32.totalorder %s16, 4
      // Predicated region
      $region21: #{tpu_custom_call.1} parent=5 // pred_check
        %p250 = pneg %p249
      $region22: #{tpu_custom_call.1} parent=5 // pred_check_branch
        %252 = sbr.rel (%p250) target = $region24
      $region23: #{tpu_custom_call.1} parent=5 // pred_region
        // Predicated region
        $region25: #{tpu_custom_call.1} parent=23 // pred_check
          %p253 = pneg %p48
        $region26: #{tpu_custom_call.1} parent=23 // pred_check_branch
          %255 = sbr.rel (%p253) target = $region28
        $region27: #{tpu_custom_call.1} parent=23 // pred_region
          %p256 = scmp.lt.s32.totalorder %s23, 1
          %s257 = scalar_select %p256, %s23, 1
          %s258 = smul.addr %s257, 2
          %s259 = smul.addr %s258, 8
          %s260 = scalar_lea.vmem %s0, %s259
        $region28: #{tpu_custom_call.1} parent=23 // pred_fallthru
          _
        // Predicated region
        $region29: #{tpu_custom_call.1} parent=23 // pred_check
          %p261 = pneg %p116
        $region30: #{tpu_custom_call.1} parent=23 // pred_check_branch
          %263 = sbr.rel (%p261) target = $region32
        $region31: #{tpu_custom_call.1} parent=23 // pred_region
          %p264 = scmp.lt.s32.totalorder %s24, 1
          %s265 = scalar_select %p264, %s24, 1
          %s266 = smul.addr %s265, 8
          %s267 = smul.addr %s266, 4
          %s268 = scalar_lea.vmem %s3, %s267
        $region32: #{tpu_custom_call.1} parent=23 // pred_fallthru
          _
        // Predicated region
        $region33: #{tpu_custom_call.1} parent=23 // pred_check
          %p269 = pneg %p142
        $region34: #{tpu_custom_call.1} parent=23 // pred_check_branch
          %271 = sbr.rel (%p269) target = $region36
        $region35: #{tpu_custom_call.1} parent=23 // pred_region
          %p272 = scmp.lt.s32.totalorder %s24, 1
          %s273 = scalar_select %p272, %s24, 1
          %s274 = smul.addr %s273, 4
          %s275 = smul.addr %s274, 4
          %s276 = scalar_lea.vmem %s4, %s275
        $region36: #{tpu_custom_call.1} parent=23 // pred_fallthru
          _
        // Predicated region
        $region37: #{tpu_custom_call.1} parent=23 // pred_check
          %p277 = pneg %p168
        $region38: #{tpu_custom_call.1} parent=23 // pred_check_branch
          %279 = sbr.rel (%p277) target = $region40
        $region39: #{tpu_custom_call.1} parent=23 // pred_region
          %p280 = scmp.lt.s32.totalorder %s24, 1
          %s281 = scalar_select %p280, %s24, 1
          %s282 = smul.addr %s281, 4
          %s283 = smul.addr %s282, 8
          %s284 = scalar_lea.vmem %s5, %s283
        $region40: #{tpu_custom_call.1} parent=23 // pred_fallthru
          _
        // Predicated region
        $region41: #{tpu_custom_call.1} parent=23 // pred_check
          %p285 = pneg %p196
        $region42: #{tpu_custom_call.1} parent=23 // pred_check_branch
          %287 = sbr.rel (%p285) target = $region44
        $region43: #{tpu_custom_call.1} parent=23 // pred_region
          %p288 = scmp.lt.s32.totalorder %s23, 1
          %s289 = scalar_select %p288, %s23, 1
          %p290 = scmp.lt.s32.totalorder %s24, 1
          %s291 = scalar_select %p290, %s24, 1
          %s292 = smul.addr %s291, 4
          %s293 = smul.addr %s289, 8
          %s294 = sadd.s32 %s292, %s293
          %s295 = smul.addr %s294, 8
          %s296 = scalar_lea.vmem %s6, %s295
        $region44: #{tpu_custom_call.1} parent=23 // pred_fallthru
          _
      $region24: #{tpu_custom_call.1} parent=5 // pred_fallthru
        _
      %p297 = scmp.le.s32.totalorder 1, %s16
      %p298 = scmp.lt.s32.totalorder %s16, 5
      %p299 = pnand %p297, %p298
      %p300 = pneg %p299
      // Predicated region
      $region45: #{tpu_custom_call.1} parent=5 // pred_check
        _
      $region46: #{tpu_custom_call.1} parent=5 // pred_check_branch
        %302 = sbr.rel (%p299) target = $region48
      $region47: #{tpu_custom_call.1} parent=5 // pred_region
        %s303 = ssub.s32 %s16, 1
        %p304 = scmp.lt.s32.totalorder %s25, 1
        %s305 = scalar_select %p304, %s25, 1
        %s306 = smul.addr %s305, 2
        %s307 = smul.addr %s306, 8
        %s308 = scalar_lea.vmem %s0, %s307
        %p309 = pneg %p54
        %p310 = pneg %p51
        %p311 = pneg %p75
        %p312 = pneg %p72
        %p313 = pneg %p96
        %p314 = pneg %p93
        %p315 = scmp.lt.s32.totalorder %s26, 1
        %s316 = scalar_select %p315, %s26, 1
        %s317 = smul.addr %s316, 8
        %s318 = smul.addr %s317, 4
        %s319 = scalar_lea.vmem %s3, %s318
        %p320 = pneg %p122
        %p321 = pneg %p119
        %p322 = scmp.lt.s32.totalorder %s26, 1
        %s323 = scalar_select %p322, %s26, 1
        %s324 = smul.addr %s323, 4
        %s325 = smul.addr %s324, 4
        %s326 = scalar_lea.vmem %s4, %s325
        %p327 = pneg %p148
        %p328 = pneg %p145
        %p329 = scmp.lt.s32.totalorder %s26, 1
        %s330 = scalar_select %p329, %s26, 1
        %s331 = smul.addr %s330, 4
        %s332 = smul.addr %s331, 8
        %s333 = scalar_lea.vmem %s5, %s332
        %p334 = pneg %p174
        %p335 = pneg %p171
        %p336 = scmp.lt.s32.totalorder %s25, 1
        %s337 = scalar_select %p336, %s25, 1
        %p338 = scmp.lt.s32.totalorder %s26, 1
        %s339 = scalar_select %p338, %s26, 1
        %s340 = smul.addr %s339, 4
        %s341 = smul.addr %s337, 8
        %s342 = sadd.s32 %s340, %s341
        %s343 = smul.addr %s342, 8
        %s344 = scalar_lea.vmem %s6, %s343
        %p345 = pneg %p202
        %p346 = pneg %p199
        %p347 = pneg %p228
        %p348 = pneg %p225
        %s349 = sand.u32 %s215, 1
        %s350 = scalar_lea.sflag [#allocation4], %s349
        %s351 = sand.u32 %s215, 1
        %s352 = smul.addr %s351, 16
        %s353 = scalar_lea.vmem [#allocation3], %s352
        %p354 = scmp.lt.s32.totalorder %s25, 1
        %s355 = scalar_select %p354, %s25, 1
        %s356 = smul.addr %s355, 2
        %s357 = smul.addr %s356, 8
        %s358 = scalar_lea.vmem %s0, %s357
        %p359 = scmp.lt.s32.totalorder %s26, 1
        %s360 = scalar_select %p359, %s26, 1
        %s361 = smul.addr %s360, 8
        %s362 = smul.addr %s361, 4
        %s363 = scalar_lea.vmem %s3, %s362
        %p364 = scmp.lt.s32.totalorder %s26, 1
        %s365 = scalar_select %p364, %s26, 1
        %s366 = smul.addr %s365, 4
        %s367 = smul.addr %s366, 4
        %s368 = scalar_lea.vmem %s4, %s367
        %p369 = scmp.lt.s32.totalorder %s26, 1
        %s370 = scalar_select %p369, %s26, 1
        %s371 = smul.addr %s370, 4
        %s372 = smul.addr %s371, 8
        %s373 = scalar_lea.vmem %s5, %s372
        %p374 = scmp.lt.s32.totalorder %s25, 1
        %s375 = scalar_select %p374, %s25, 1
        %p376 = scmp.lt.s32.totalorder %s26, 1
        %s377 = scalar_select %p376, %s26, 1
        %s378 = smul.addr %s377, 4
        %s379 = smul.addr %s375, 8
        %s380 = sadd.s32 %s378, %s379
        %s381 = smul.addr %s380, 8
        %s382 = scalar_lea.vmem %s6, %s381
        %v384 = vld [vmem:[%s1] sm:$0xff]
        %v385 = vld [vmem:[%s1 + $0x8] sm:$0xff]
        %p386 = scmp.eq.s32.totalorder %s26, 0
        // Predicated region
        $region49: #{tpu_custom_call.1} parent=47 // pred_check
          %p387 = pneg %p386
        $region50: #{tpu_custom_call.1} parent=47 // pred_check_branch
          %389 = sbr.rel (%p387) target = $region52
        $region51: #{tpu_custom_call.1} parent=47 // pred_region
          %v390 = vld [vmem:[%s358] sm:$0xff]
          %v391 = vld [vmem:[%s358 + $0x8] sm:$0xff]
          %v392 = vadd.f32 %v390, %v391
          %v393 = vrot.slane %v392, 4
          %v394 = vadd.f32 %v392, %v393
          %v395 = vrot.slane %v394, 2
          %v396 = vadd.f32 %v394, %v395
          %v397 = vrot.slane %v396, 1
          %v398 = vadd.f32 %v396, %v397
          %v399 = vrcp.pop 16.0
          %v400 = vmul.f32 %v398, %v399
          %v401 = vsub.f32 %v390, %v400
          %v402 = vsub.f32 %v391, %v400
          %v403 = vmul.f32 %v401, %v401
          %v404 = vmul.f32 %v402, %v402
          %v405 = vadd.f32 %v403, %v404
          %v406 = vrot.slane %v405, 4
          %v407 = vadd.f32 %v405, %v406
          %v408 = vrot.slane %v407, 2
          %v409 = vadd.f32 %v407, %v408
          %v410 = vrot.slane %v409, 1
          %v411 = vadd.f32 %v409, %v410
          %v412 = vmul.f32 %v411, %v399
          %v413 = vadd.f32 %v412, 1e-05
          %v414 = vrsqrt.pop %v413
          %v415 = vmul.f32 %v401, %v414
          %v416 = vmul.f32 %v402, %v414
          %418 = vset.pattern.permute.xlu0 0
          %419 = vperm.xlu0 %418, %v384
          %v420 = vpop.permute.xlu0 %419
          %423 = vset.pattern.permute.xlu0 0
          %424 = vperm.xlu0 %423, %v385
          %v425 = vpop.permute.xlu0 %424
          %v427 = vmul.f32 %v415, %v420
          %v428 = vmul.f32 %v416, %v425
          %429 = vset.pattern.permute.xlu0 1
          %430 = vperm.xlu0 %429, %v384
          %v431 = vpop.permute.xlu0 %430
          %433 = vset.pattern.permute.xlu0 1
          %434 = vperm.xlu0 %433, %v385
          %v435 = vpop.permute.xlu0 %434
          %v437 = vadd.f32 %v427, %v431
          %v438 = vadd.f32 %v428, %v435
          %v439 = vld [vmem:[%s2] sm:$0xf]
          %v440 = vld [vmem:[%s2 + $0x4] sm:$0xf]
          %v441 = vpack.c.bf16 %v438, %v437
          %442 = vset.pattern.permute.xlu0 2
          %443 = vperm.xlu0 %442, %v384
          %v444 = vpop.permute.xlu0 %443
          %446 = vset.pattern.permute.xlu0 2
          %447 = vperm.xlu0 %446, %v385
          %v448 = vpop.permute.xlu0 %447
          %v452 = vunpack.c.l.b16 %v439
          %v453 = vunpack.c.l.b16 %v440
          %v454 = vpack.c.b16 %v453, %v452
          %vm455 = vcmask 130048
          %v457 = vsel %vm455, %v454, 0
          %459 = vmatprep.subr.bf16.mxu0 0
          %460 = vmatpush1.bf16.msra.mxu0 %v441
          %461 = vmatprep.subr.bf16.mxu0 0
          %462 = vmatpush1.bf16.msra.mxu0 0
          %463 = vmatprep.subr.bf16.mxu0 0
          %464 = vmatpush1.bf16.msra.mxu0 0
          %465 = vmatprep.subr.bf16.mxu0 0
          %466 = vmatpush1.bf16.msra.mxu0 0
          %467 = vmatprep.subr.bf16.mxu0 0
          %468 = vmatpush1.bf16.msra.mxu0 0
          %469 = vmatprep.subr.bf16.mxu0 0
          %470 = vmatpush1.bf16.msra.mxu0 0
          %471 = vmatprep.subr.bf16.mxu0 0
          %472 = vmatpush1.bf16.msra.mxu0 0
          %473 = vmatprep.subr.bf16.mxu0 0
          %474 = vmatpush1.bf16.msra.mxu0 0
          %475 = vmatprep.subr.bf16.mxu0 0
          %476 = vmatpush1.bf16.msra.mxu0 0
          %477 = vmatprep.subr.bf16.mxu0 0
          %478 = vmatpush1.bf16.msra.mxu0 0
          %479 = vmatprep.subr.bf16.mxu0 0
          %480 = vmatpush1.bf16.msra.mxu0 0
          %481 = vmatprep.subr.bf16.mxu0 0
          %482 = vmatpush1.bf16.msra.mxu0 0
          %483 = vmatprep.subr.bf16.mxu0 0
          %484 = vmatpush1.bf16.msra.mxu0 0
          %485 = vmatprep.subr.bf16.mxu0 0
          %486 = vmatpush1.bf16.msra.mxu0 0
          %487 = vmatprep.subr.bf16.mxu0 0
          %488 = vmatpush1.bf16.msra.mxu0 0
          %489 = vmatprep.subr.bf16.mxu0 0
          %490 = vmatpush1.bf16.msra.mxu0 0
          %491 = vmatprep.mubr.bf16.mxu0 0
          %492 = vmatmul.mubr.bf16.gmra.mrb[0].mxu0 %v457
          %v493 = vpop.f32.mrb[0].mxu0
          %v494 = vadd.f32 %v444, %v493
          %v495 = vpop.f32.mrb[0].mxu0
          %v496 = vpop.f32.mrb[0].mxu0
          %v497 = vadd.f32 %v448, %v496
          %v498 = vpop.f32.mrb[0].mxu0
          %499 = vdwg.mxu0
          %500 = vst [vmem:[#allocation2] sm:$0xff] %v494
          %501 = vst [vmem:[#allocation2 + $0x8] sm:$0xff] %v497
        $region52: #{tpu_custom_call.1} parent=47 // pred_fallthru
          _
        %v502 = vld [vmem:[#allocation2] sm:$0xff]
        %v503 = vld [vmem:[#allocation2 + $0x8] sm:$0xff]
        %v504 = vld [vmem:[%s373] sm:$0xff]
        %v505 = vld [vmem:[%s373 + $0x8] sm:$0xff]
        %v506 = vld [vmem:[%s373 + $0x10] sm:$0xff]
        %v507 = vld [vmem:[%s373 + $0x18] sm:$0xff]
        %v508 = vld [vmem:[%s382] sm:$0xff]
        %v509 = vld [vmem:[%s382 + $0x8] sm:$0xff]
        %v510 = vld [vmem:[%s382 + $0x10] sm:$0xff]
        %v511 = vld [vmem:[%s382 + $0x18] sm:$0xff]
        %v512 = vlaneseq
        %v513 = vand.u32 %v512, 127
        %v514 = vld [vmem:[%s363] sm:$0xf]
        %v515 = vld [vmem:[%s363 + $0x4] sm:$0xf]
        %v516 = vld [vmem:[%s363 + $0x8] sm:$0xf]
        %v517 = vld [vmem:[%s363 + $0xc] sm:$0xf]
        %v518 = vpack.c.bf16 %v503, %v502
        %520 = vset.pattern.permute.xlu0 0
        %521 = vperm.xlu0 %520, %v504
        %v522 = vpop.permute.xlu0 %521
        %525 = vset.pattern.permute.xlu0 0
        %526 = vperm.xlu0 %525, %v505
        %v527 = vpop.permute.xlu0 %526
        %530 = vset.pattern.permute.xlu0 0
        %531 = vperm.xlu0 %530, %v506
        %v532 = vpop.permute.xlu0 %531
        %535 = vset.pattern.permute.xlu0 0
        %536 = vperm.xlu0 %535, %v507
        %v537 = vpop.permute.xlu0 %536
        %v543 = vunpack.c.l.b16 %v514
        %v544 = vunpack.c.l.b16 %v515
        %v545 = vunpack.c.l.b16 %v516
        %v546 = vunpack.c.l.b16 %v517
        %v547 = vpack.c.b16 %v544, %v543
        %v548 = vpack.c.b16 %v546, %v545
        %vm549 = vcmask 130048
        %v551 = vsel %vm549, %v547, 0
        %v554 = vsel %vm549, %v548, 0
        %556 = vmatprep.subr.bf16.mxu0 0
        %557 = vmatpush1.bf16.msra.mxu0 %v518
        %558 = vmatprep.subr.bf16.mxu0 0
        %559 = vmatpush1.bf16.msra.mxu0 0
        %560 = vmatprep.subr.bf16.mxu0 0
        %561 = vmatpush1.bf16.msra.mxu0 0
        %562 = vmatprep.subr.bf16.mxu0 0
        %563 = vmatpush1.bf16.msra.mxu0 0
        %564 = vmatprep.subr.bf16.mxu0 0
        %565 = vmatpush1.bf16.msra.mxu0 0
        %566 = vmatprep.subr.bf16.mxu0 0
        %567 = vmatpush1.bf16.msra.mxu0 0
        %568 = vmatprep.subr.bf16.mxu0 0
        %569 = vmatpush1.bf16.msra.mxu0 0
        %570 = vmatprep.subr.bf16.mxu0 0
        %571 = vmatpush1.bf16.msra.mxu0 0
        %572 = vmatprep.subr.bf16.mxu0 0
        %573 = vmatpush1.bf16.msra.mxu0 0
        %574 = vmatprep.subr.bf16.mxu0 0
        %575 = vmatpush1.bf16.msra.mxu0 0
        %576 = vmatprep.subr.bf16.mxu0 0
        %577 = vmatpush1.bf16.msra.mxu0 0
        %578 = vmatprep.subr.bf16.mxu0 0
        %579 = vmatpush1.bf16.msra.mxu0 0
        %580 = vmatprep.subr.bf16.mxu0 0
        %581 = vmatpush1.bf16.msra.mxu0 0
        %582 = vmatprep.subr.bf16.mxu0 0
        %583 = vmatpush1.bf16.msra.mxu0 0
        %584 = vmatprep.subr.bf16.mxu0 0
        %585 = vmatpush1.bf16.msra.mxu0 0
        %586 = vmatprep.subr.bf16.mxu0 0
        %587 = vmatpush1.bf16.msra.mxu0 0
        %588 = vmatprep.mubr.bf16.mxu0 0
        %589 = vmatmul.mubr.bf16.gmra.mrb[0].mxu0 %v551
        %v590 = vpop.f32.mrb[0].mxu0
        %v591 = vadd.f32 %v522, %v590
        %v592 = vpop.f32.mrb[0].mxu0
        %v593 = vpop.f32.mrb[0].mxu0
        %v594 = vadd.f32 %v527, %v593
        %v595 = vpop.f32.mrb[0].mxu0
        %596 = vmatprep.mubr.bf16.mxu0 0
        %597 = vmatmul.mubr.bf16.gmra.mrb[0].mxu0 %v554
        %v598 = vpop.f32.mrb[0].mxu0
        %v599 = vadd.f32 %v532, %v598
        %v600 = vpop.f32.mrb[0].mxu0
        %v601 = vpop.f32.mrb[0].mxu0
        %v602 = vadd.f32 %v537, %v601
        %v603 = vpop.f32.mrb[0].mxu0
        %604 = vdwg.mxu0
        %606 = vset.pattern.permute.xlu0 0
        %607 = vperm.xlu0 %606, %v508
        %v608 = vpop.permute.xlu0 %607
        %611 = vset.pattern.permute.xlu0 0
        %612 = vperm.xlu0 %611, %v509
        %v613 = vpop.permute.xlu0 %612
        %616 = vset.pattern.permute.xlu0 0
        %617 = vperm.xlu0 %616, %v510
        %v618 = vpop.permute.xlu0 %617
        %621 = vset.pattern.permute.xlu0 0
        %622 = vperm.xlu0 %621, %v511
        %v623 = vpop.permute.xlu0 %622
        %v625 = vadd.f32 %v591, %v608
        %v626 = vadd.f32 %v594, %v613
        %v627 = vadd.f32 %v599, %v618
        %v628 = vadd.f32 %v602, %v623
        %vm629 = vcmp.ge.f32.partialorder %v625, 0.0
        %vm630 = vcmp.ge.f32.partialorder %v626, 0.0
        %vm631 = vcmp.ge.f32.partialorder %v627, 0.0
        %vm632 = vcmp.ge.f32.partialorder %v628, 0.0
        %633 = vset.pattern.permute.xlu0 10
        %634 = vperm.xlu0 %633, %v504
        %v635 = vpop.permute.xlu0 %634
        %637 = vset.pattern.permute.xlu0 10
        %638 = vperm.xlu0 %637, %v505
        %v639 = vpop.permute.xlu0 %638
        %641 = vset.pattern.permute.xlu0 10
        %642 = vperm.xlu0 %641, %v506
        %v643 = vpop.permute.xlu0 %642
        %645 = vset.pattern.permute.xlu0 10
        %646 = vperm.xlu0 %645, %v507
        %v647 = vpop.permute.xlu0 %646
        %v649 = vmul.f32 %v635, %v625
        %v650 = vmul.f32 %v639, %v626
        %v651 = vmul.f32 %v643, %v627
        %v652 = vmul.f32 %v647, %v628
        %v653 = vsel %vm629, %v625, %v649
        %v654 = vsel %vm630, %v626, %v650
        %v655 = vsel %vm631, %v627, %v651
        %v656 = vsel %vm632, %v628, %v652
        %657 = vadd.xlane.f32.xlu0 %v653
        %v658 = vpop.xlane.xlu0 %657
        %659 = vadd.xlane.f32.xlu0 %v654
        %v660 = vpop.xlane.xlu0 %659
        %661 = vadd.xlane.f32.xlu0 %v655
        %v662 = vpop.xlane.xlu0 %661
        %663 = vadd.xlane.f32.xlu0 %v656
        %v664 = vpop.xlane.xlu0 %663
        %v665 = vrcp.pop 128.0
        %v666 = vmul.f32 %v658, %v665
        %v667 = vmul.f32 %v660, %v665
        %v668 = vmul.f32 %v662, %v665
        %v669 = vmul.f32 %v664, %v665
        %v670 = vadd.f32 %v666, %v667
        %v671 = vadd.f32 %v670, %v668
        %v672 = vadd.f32 %v671, %v669
        %v673 = vrot.slane %v672, 4
        %v674 = vadd.f32 %v672, %v673
        %v675 = vrot.slane %v674, 2
        %v676 = vadd.f32 %v674, %v675
        %v677 = vrot.slane %v676, 1
        %v678 = vadd.f32 %v676, %v677
        %v679 = vrcp.pop 32.0
        %v680 = vmul.f32 %v678, %v679
        %v681 = vsub.f32 %v653, %v680
        %v682 = vsub.f32 %v654, %v680
        %v683 = vsub.f32 %v655, %v680
        %v684 = vsub.f32 %v656, %v680
        %v685 = vmul.f32 %v681, %v681
        %v686 = vmul.f32 %v682, %v682
        %v687 = vmul.f32 %v683, %v683
        %v688 = vmul.f32 %v684, %v684
        %689 = vadd.xlane.f32.xlu0 %v685
        %v690 = vpop.xlane.xlu0 %689
        %691 = vadd.xlane.f32.xlu0 %v686
        %v692 = vpop.xlane.xlu0 %691
        %693 = vadd.xlane.f32.xlu0 %v687
        %v694 = vpop.xlane.xlu0 %693
        %695 = vadd.xlane.f32.xlu0 %v688
        %v696 = vpop.xlane.xlu0 %695
        %v697 = vmul.f32 %v690, %v665
        %v698 = vmul.f32 %v692, %v665
        %v699 = vmul.f32 %v694, %v665
        %v700 = vmul.f32 %v696, %v665
        %v701 = vadd.f32 %v697, %v698
        %v702 = vadd.f32 %v701, %v699
        %v703 = vadd.f32 %v702, %v700
        %v704 = vrot.slane %v703, 4
        %v705 = vadd.f32 %v703, %v704
        %v706 = vrot.slane %v705, 2
        %v707 = vadd.f32 %v705, %v706
        %v708 = vrot.slane %v707, 1
        %v709 = vadd.f32 %v707, %v708
        %v710 = vmul.f32 %v709, %v679
        %v711 = vadd.f32 %v710, 1e-08
        %v712 = vrsqrt.pop %v711
        %v713 = vmul.f32 %v504, %v712
        %v714 = vmul.f32 %v505, %v712
        %v715 = vmul.f32 %v506, %v712
        %v716 = vmul.f32 %v507, %v712
        %718 = vset.pattern.permute.xlu0 1
        %719 = vperm.xlu0 %718, %v713
        %v720 = vpop.permute.xlu0 %719
        %723 = vset.pattern.permute.xlu0 1
        %724 = vperm.xlu0 %723, %v714
        %v725 = vpop.permute.xlu0 %724
        %728 = vset.pattern.permute.xlu0 1
        %729 = vperm.xlu0 %728, %v715
        %v730 = vpop.permute.xlu0 %729
        %733 = vset.pattern.permute.xlu0 1
        %734 = vperm.xlu0 %733, %v716
        %v735 = vpop.permute.xlu0 %734
        %v737 = vmul.f32 %v681, %v720
        %v738 = vmul.f32 %v682, %v725
        %v739 = vmul.f32 %v683, %v730
        %v740 = vmul.f32 %v684, %v735
        %741 = vset.pattern.permute.xlu0 2
        %742 = vperm.xlu0 %741, %v504
        %v743 = vpop.permute.xlu0 %742
        %745 = vset.pattern.permute.xlu0 2
        %746 = vperm.xlu0 %745, %v505
        %v747 = vpop.permute.xlu0 %746
        %749 = vset.pattern.permute.xlu0 2
        %750 = vperm.xlu0 %749, %v506
        %v751 = vpop.permute.xlu0 %750
        %753 = vset.pattern.permute.xlu0 2
        %754 = vperm.xlu0 %753, %v507
        %v755 = vpop.permute.xlu0 %754
        %v757 = vadd.f32 %v737, %v743
        %v758 = vadd.f32 %v738, %v747
        %v759 = vadd.f32 %v739, %v751
        %v760 = vadd.f32 %v740, %v755
        %vm761 = vcmp.ge.s32.totalorder %v513, 1
        %762 = vrot.lane.b32.xlu0 %v757, 1
        %v763 = vpop.permute.xlu0 %762
        %764 = vrot.lane.b32.xlu0 %v758, 1
        %v765 = vpop.permute.xlu0 %764
        %766 = vrot.lane.b32.xlu0 %v759, 1
        %v767 = vpop.permute.xlu0 %766
        %768 = vrot.lane.b32.xlu0 %v760, 1
        %v769 = vpop.permute.xlu0 %768
        %v770 = vsel %vm761, 1, 0
        %vm771 = vcmp.eq.s32.totalorder %v770, 1
        %v772 = vsel %vm771, %v763, 0.0
        %v773 = vsel %vm771, %v765, 0.0
        %v774 = vsel %vm771, %v767, 0.0
        %v775 = vsel %vm771, %v769, 0.0
        %vm776 = vcmp.lt.s32.totalorder %v513, 127
        %777 = vrot.lane.b32.xlu0 %v757, 127
        %v778 = vpop.permute.xlu0 %777
        %779 = vrot.lane.b32.xlu0 %v758, 127
        %v780 = vpop.permute.xlu0 %779
        %781 = vrot.lane.b32.xlu0 %v759, 127
        %v782 = vpop.permute.xlu0 %781
        %783 = vrot.lane.b32.xlu0 %v760, 127
        %v784 = vpop.permute.xlu0 %783
        %v785 = vsel %vm776, 1, 0
        %vm786 = vcmp.eq.s32.totalorder %v785, 1
        %v787 = vsel %vm786, %v778, 0.0
        %v788 = vsel %vm786, %v780, 0.0
        %v789 = vsel %vm786, %v782, 0.0
        %v790 = vsel %vm786, %v784, 0.0
        %791 = vset.pattern.permute.xlu0 3
        %792 = vperm.xlu0 %791, %v504
        %v793 = vpop.permute.xlu0 %792
        %795 = vset.pattern.permute.xlu0 3
        %796 = vperm.xlu0 %795, %v505
        %v797 = vpop.permute.xlu0 %796
        %799 = vset.pattern.permute.xlu0 3
        %800 = vperm.xlu0 %799, %v506
        %v801 = vpop.permute.xlu0 %800
        %803 = vset.pattern.permute.xlu0 3
        %804 = vperm.xlu0 %803, %v507
        %v805 = vpop.permute.xlu0 %804
        %v807 = vmul.f32 %v793, %v772
        %v808 = vmul.f32 %v797, %v773
        %v809 = vmul.f32 %v801, %v774
        %v810 = vmul.f32 %v805, %v775
        %811 = vset.pattern.permute.xlu0 4
        %812 = vperm.xlu0 %811, %v504
        %v813 = vpop.permute.xlu0 %812
        %815 = vset.pattern.permute.xlu0 4
        %816 = vperm.xlu0 %815, %v505
        %v817 = vpop.permute.xlu0 %816
        %819 = vset.pattern.permute.xlu0 4
        %820 = vperm.xlu0 %819, %v506
        %v821 = vpop.permute.xlu0 %820
        %823 = vset.pattern.permute.xlu0 4
        %824 = vperm.xlu0 %823, %v507
        %v825 = vpop.permute.xlu0 %824
        %v827 = vmul.f32 %v813, %v757
        %v828 = vmul.f32 %v817, %v758
        %v829 = vmul.f32 %v821, %v759
        %v830 = vmul.f32 %v825, %v760
        %v831 = vadd.f32 %v807, %v827
        %v832 = vadd.f32 %v808, %v828
        %v833 = vadd.f32 %v809, %v829
        %v834 = vadd.f32 %v810, %v830
        %835 = vset.pattern.permute.xlu0 5
        %836 = vperm.xlu0 %835, %v504
        %v837 = vpop.permute.xlu0 %836
        %839 = vset.pattern.permute.xlu0 5
        %840 = vperm.xlu0 %839, %v505
        %v841 = vpop.permute.xlu0 %840
        %843 = vset.pattern.permute.xlu0 5
        %844 = vperm.xlu0 %843, %v506
        %v845 = vpop.permute.xlu0 %844
        %847 = vset.pattern.permute.xlu0 5
        %848 = vperm.xlu0 %847, %v507
        %v849 = vpop.permute.xlu0 %848
        %v851 = vmul.f32 %v837, %v787
        %v852 = vmul.f32 %v841, %v788
        %v853 = vmul.f32 %v845, %v789
        %v854 = vmul.f32 %v849, %v790
        %v855 = vadd.f32 %v831, %v851
        %v856 = vadd.f32 %v832, %v852
        %v857 = vadd.f32 %v833, %v853
        %v858 = vadd.f32 %v834, %v854
        %859 = vset.pattern.permute.xlu0 6
        %860 = vperm.xlu0 %859, %v504
        %v861 = vpop.permute.xlu0 %860
        %863 = vset.pattern.permute.xlu0 6
        %864 = vperm.xlu0 %863, %v505
        %v865 = vpop.permute.xlu0 %864
        %867 = vset.pattern.permute.xlu0 6
        %868 = vperm.xlu0 %867, %v506
        %v869 = vpop.permute.xlu0 %868
        %871 = vset.pattern.permute.xlu0 6
        %872 = vperm.xlu0 %871, %v507
        %v873 = vpop.permute.xlu0 %872
        %v875 = vadd.f32 %v855, %v861
        %v876 = vadd.f32 %v856, %v865
        %v877 = vadd.f32 %v857, %v869
        %v878 = vadd.f32 %v858, %v873
        %vm879 = vcmp.ge.f32.partialorder %v875, 0.0
        %vm880 = vcmp.ge.f32.partialorder %v876, 0.0
        %vm881 = vcmp.ge.f32.partialorder %v877, 0.0
        %vm882 = vcmp.ge.f32.partialorder %v878, 0.0
        %883 = vset.pattern.permute.xlu0 11
        %884 = vperm.xlu0 %883, %v504
        %v885 = vpop.permute.xlu0 %884
        %887 = vset.pattern.permute.xlu0 11
        %888 = vperm.xlu0 %887, %v505
        %v889 = vpop.permute.xlu0 %888
        %891 = vset.pattern.permute.xlu0 11
        %892 = vperm.xlu0 %891, %v506
        %v893 = vpop.permute.xlu0 %892
        %895 = vset.pattern.permute.xlu0 11
        %896 = vperm.xlu0 %895, %v507
        %v897 = vpop.permute.xlu0 %896
        %v899 = vmul.f32 %v885, %v875
        %v900 = vmul.f32 %v889, %v876
        %v901 = vmul.f32 %v893, %v877
        %v902 = vmul.f32 %v897, %v878
        %v903 = vsel %vm879, %v875, %v899
        %v904 = vsel %vm880, %v876, %v900
        %v905 = vsel %vm881, %v877, %v901
        %v906 = vsel %vm882, %v878, %v902
        %907 = vadd.xlane.f32.xlu0 %v903
        %v908 = vpop.xlane.xlu0 %907
        %909 = vadd.xlane.f32.xlu0 %v904
        %v910 = vpop.xlane.xlu0 %909
        %911 = vadd.xlane.f32.xlu0 %v905
        %v912 = vpop.xlane.xlu0 %911
        %913 = vadd.xlane.f32.xlu0 %v906
        %v914 = vpop.xlane.xlu0 %913
        %v915 = vmul.f32 %v908, %v665
        %v916 = vmul.f32 %v910, %v665
        %v917 = vmul.f32 %v912, %v665
        %v918 = vmul.f32 %v914, %v665
        %v919 = vadd.f32 %v915, %v916
        %v920 = vadd.f32 %v919, %v917
        %v921 = vadd.f32 %v920, %v918
        %v922 = vrot.slane %v921, 4
        %v923 = vadd.f32 %v921, %v922
        %v924 = vrot.slane %v923, 2
        %v925 = vadd.f32 %v923, %v924
        %v926 = vrot.slane %v925, 1
        %v927 = vadd.f32 %v925, %v926
        %v928 = vmul.f32 %v927, %v679
        %v929 = vsub.f32 %v903, %v928
        %v930 = vsub.f32 %v904, %v928
        %v931 = vsub.f32 %v905, %v928
        %v932 = vsub.f32 %v906, %v928
        %v933 = vmul.f32 %v929, %v929
        %v934 = vmul.f32 %v930, %v930
        %v935 = vmul.f32 %v931, %v931
        %v936 = vmul.f32 %v932, %v932
        %937 = vadd.xlane.f32.xlu0 %v933
        %v938 = vpop.xlane.xlu0 %937
        %939 = vadd.xlane.f32.xlu0 %v934
        %v940 = vpop.xlane.xlu0 %939
        %941 = vadd.xlane.f32.xlu0 %v935
        %v942 = vpop.xlane.xlu0 %941
        %943 = vadd.xlane.f32.xlu0 %v936
        %v944 = vpop.xlane.xlu0 %943
        %v945 = vmul.f32 %v938, %v665
        %v946 = vmul.f32 %v940, %v665
        %v947 = vmul.f32 %v942, %v665
        %v948 = vmul.f32 %v944, %v665
        %v949 = vadd.f32 %v945, %v946
        %v950 = vadd.f32 %v949, %v947
        %v951 = vadd.f32 %v950, %v948
        %v952 = vrot.slane %v951, 4
        %v953 = vadd.f32 %v951, %v952
        %v954 = vrot.slane %v953, 2
        %v955 = vadd.f32 %v953, %v954
        %v956 = vrot.slane %v955, 1
        %v957 = vadd.f32 %v955, %v956
        %v958 = vmul.f32 %v957, %v679
        %v959 = vadd.f32 %v958, 1e-08
        %v960 = vrsqrt.pop %v959
        %v961 = vmul.f32 %v504, %v960
        %v962 = vmul.f32 %v505, %v960
        %v963 = vmul.f32 %v506, %v960
        %v964 = vmul.f32 %v507, %v960
        %966 = vset.pattern.permute.xlu0 7
        %967 = vperm.xlu0 %966, %v961
        %v968 = vpop.permute.xlu0 %967
        %971 = vset.pattern.permute.xlu0 7
        %972 = vperm.xlu0 %971, %v962
        %v973 = vpop.permute.xlu0 %972
        %976 = vset.pattern.permute.xlu0 7
        %977 = vperm.xlu0 %976, %v963
        %v978 = vpop.permute.xlu0 %977
        %981 = vset.pattern.permute.xlu0 7
        %982 = vperm.xlu0 %981, %v964
        %v983 = vpop.permute.xlu0 %982
        %v985 = vmul.f32 %v929, %v968
        %v986 = vmul.f32 %v930, %v973
        %v987 = vmul.f32 %v931, %v978
        %v988 = vmul.f32 %v932, %v983
        %989 = vset.pattern.permute.xlu0 8
        %990 = vperm.xlu0 %989, %v504
        %v991 = vpop.permute.xlu0 %990
        %993 = vset.pattern.permute.xlu0 8
        %994 = vperm.xlu0 %993, %v505
        %v995 = vpop.permute.xlu0 %994
        %997 = vset.pattern.permute.xlu0 8
        %998 = vperm.xlu0 %997, %v506
        %v999 = vpop.permute.xlu0 %998
        %1001 = vset.pattern.permute.xlu0 8
        %1002 = vperm.xlu0 %1001, %v507
        %v1003 = vpop.permute.xlu0 %1002
        %v1005 = vadd.f32 %v985, %v991
        %v1006 = vadd.f32 %v986, %v995
        %v1007 = vadd.f32 %v987, %v999
        %v1008 = vadd.f32 %v988, %v1003
        %v1009 = vld [vmem:[%s368] sm:$0xf]
        %v1010 = vld [vmem:[%s368 + $0x4] sm:$0xf]
        %v1011 = vpack.c.bf16 %v1006, %v1005
        %v1012 = vpack.c.bf16 %v1008, %v1007
        %v1015 = vunpack.c.l.b16 %v1009
        %v1016 = vunpack.c.l.b16 %v1010
        %v1017 = vpack.c.b16 %v1016, %v1015
        %vm1018 = vcmask 261120
        %v1020 = vsel %vm1018, %v1017, 0
        %1022 = vmatprep.subr.bf16.mxu0 0
        %1023 = vmatpush1.bf16.msra.mxu0 %v1011
        %1024 = vmatprep.subr.bf16.mxu0 0
        %1025 = vmatpush1.bf16.msra.mxu0 %v1012
        %1026 = vmatprep.subr.bf16.mxu0 0
        %1027 = vmatpush1.bf16.msra.mxu0 0
        %1028 = vmatprep.subr.bf16.mxu0 0
        %1029 = vmatpush1.bf16.msra.mxu0 0
        %1030 = vmatprep.subr.bf16.mxu0 0
        %1031 = vmatpush1.bf16.msra.mxu0 0
        %1032 = vmatprep.subr.bf16.mxu0 0
        %1033 = vmatpush1.bf16.msra.mxu0 0
        %1034 = vmatprep.subr.bf16.mxu0 0
        %1035 = vmatpush1.bf16.msra.mxu0 0
        %1036 = vmatprep.subr.bf16.mxu0 0
        %1037 = vmatpush1.bf16.msra.mxu0 0
        %1038 = vmatprep.subr.bf16.mxu0 0
        %1039 = vmatpush1.bf16.msra.mxu0 0
        %1040 = vmatprep.subr.bf16.mxu0 0
        %1041 = vmatpush1.bf16.msra.mxu0 0
        %1042 = vmatprep.subr.bf16.mxu0 0
        %1043 = vmatpush1.bf16.msra.mxu0 0
        %1044 = vmatprep.subr.bf16.mxu0 0
        %1045 = vmatpush1.bf16.msra.mxu0 0
        %1046 = vmatprep.subr.bf16.mxu0 0
        %1047 = vmatpush1.bf16.msra.mxu0 0
        %1048 = vmatprep.subr.bf16.mxu0 0
        %1049 = vmatpush1.bf16.msra.mxu0 0
        %1050 = vmatprep.subr.bf16.mxu0 0
        %1051 = vmatpush1.bf16.msra.mxu0 0
        %1052 = vmatprep.subr.bf16.mxu0 0
        %1053 = vmatpush1.bf16.msra.mxu0 0
        %1054 = vmatprep.mubr.bf16.mxu0 0
        %1055 = vmatmul.mubr.bf16.gmra.mrb[0].mxu0 %v1020
        %v1056 = vpop.f32.mrb[0].mxu0
        %v1057 = vadd.f32 0.0, %v1056
        %v1058 = vpop.f32.mrb[0].mxu0
        %v1059 = vpop.f32.mrb[0].mxu0
        %v1060 = vadd.f32 0.0, %v1059
        %v1061 = vpop.f32.mrb[0].mxu0
        %1062 = vdwg.mxu0
        %v1063 = vadd.f32 %v502, %v1057
        %v1064 = vadd.f32 %v503, %v1060
        %1065 = vset.pattern.permute.xlu0 9
        %1066 = vperm.xlu0 %1065, %v504
        %v1067 = vpop.permute.xlu0 %1066
        %1069 = vset.pattern.permute.xlu0 9
        %1070 = vperm.xlu0 %1069, %v505
        %v1071 = vpop.permute.xlu0 %1070
        %v1073 = vadd.f32 %v1063, %v1067
        %v1074 = vadd.f32 %v1064, %v1071
        %s1075 = scalar_lea.vmem %s363, 16
        %v1076 = vld [vmem:[%s1075] sm:$0xf]
        %v1077 = vld [vmem:[%s1075 + $0x4] sm:$0xf]
        %v1078 = vld [vmem:[%s1075 + $0x8] sm:$0xf]
        %v1079 = vld [vmem:[%s1075 + $0xc] sm:$0xf]
        %v1080 = vpack.c.bf16 %v1074, %v1073
        %1081 = vset.pattern.permute.xlu0 12
        %1082 = vperm.xlu0 %1081, %v504
        %v1083 = vpop.permute.xlu0 %1082
        %1085 = vset.pattern.permute.xlu0 12
        %1086 = vperm.xlu0 %1085, %v505
        %v1087 = vpop.permute.xlu0 %1086
        %1089 = vset.pattern.permute.xlu0 12
        %1090 = vperm.xlu0 %1089, %v506
        %v1091 = vpop.permute.xlu0 %1090
        %1093 = vset.pattern.permute.xlu0 12
        %1094 = vperm.xlu0 %1093, %v507
        %v1095 = vpop.permute.xlu0 %1094
        %v1101 = vunpack.c.l.b16 %v1076
        %v1102 = vunpack.c.l.b16 %v1077
        %v1103 = vunpack.c.l.b16 %v1078
        %v1104 = vunpack.c.l.b16 %v1079
        %v1105 = vpack.c.b16 %v1102, %v1101
        %v1106 = vpack.c.b16 %v1104, %v1103
        %v1108 = vsel %vm549, %v1105, 0
        %v1111 = vsel %vm549, %v1106, 0
        %1113 = vmatprep.subr.bf16.mxu0 0
        %1114 = vmatpush1.bf16.msra.mxu0 %v1080
        %1115 = vmatprep.subr.bf16.mxu0 0
        %1116 = vmatpush1.bf16.msra.mxu0 0
        %1117 = vmatprep.subr.bf16.mxu0 0
        %1118 = vmatpush1.bf16.msra.mxu0 0
        %1119 = vmatprep.subr.bf16.mxu0 0
        %1120 = vmatpush1.bf16.msra.mxu0 0
        %1121 = vmatprep.subr.bf16.mxu0 0
        %1122 = vmatpush1.bf16.msra.mxu0 0
        %1123 = vmatprep.subr.bf16.mxu0 0
        %1124 = vmatpush1.bf16.msra.mxu0 0
        %1125 = vmatprep.subr.bf16.mxu0 0
        %1126 = vmatpush1.bf16.msra.mxu0 0
        %1127 = vmatprep.subr.bf16.mxu0 0
        %1128 = vmatpush1.bf16.msra.mxu0 0
        %1129 = vmatprep.subr.bf16.mxu0 0
        %1130 = vmatpush1.bf16.msra.mxu0 0
        %1131 = vmatprep.subr.bf16.mxu0 0
        %1132 = vmatpush1.bf16.msra.mxu0 0
        %1133 = vmatprep.subr.bf16.mxu0 0
        %1134 = vmatpush1.bf16.msra.mxu0 0
        %1135 = vmatprep.subr.bf16.mxu0 0
        %1136 = vmatpush1.bf16.msra.mxu0 0
        %1137 = vmatprep.subr.bf16.mxu0 0
        %1138 = vmatpush1.bf16.msra.mxu0 0
        %1139 = vmatprep.subr.bf16.mxu0 0
        %1140 = vmatpush1.bf16.msra.mxu0 0
        %1141 = vmatprep.subr.bf16.mxu0 0
        %1142 = vmatpush1.bf16.msra.mxu0 0
        %1143 = vmatprep.subr.bf16.mxu0 0
        %1144 = vmatpush1.bf16.msra.mxu0 0
        %1145 = vmatprep.mubr.bf16.mxu0 0
        %1146 = vmatmul.mubr.bf16.gmra.mrb[0].mxu0 %v1108
        %v1147 = vpop.f32.mrb[0].mxu0
        %v1148 = vadd.f32 %v1083, %v1147
        %v1149 = vpop.f32.mrb[0].mxu0
        %v1150 = vpop.f32.mrb[0].mxu0
        %v1151 = vadd.f32 %v1087, %v1150
        %v1152 = vpop.f32.mrb[0].mxu0
        %1153 = vmatprep.mubr.bf16.mxu0 0
        %1154 = vmatmul.mubr.bf16.gmra.mrb[0].mxu0 %v1111
        %v1155 = vpop.f32.mrb[0].mxu0
        %v1156 = vadd.f32 %v1091, %v1155
        %v1157 = vpop.f32.mrb[0].mxu0
        %v1158 = vpop.f32.mrb[0].mxu0
        %v1159 = vadd.f32 %v1095, %v1158
        %v1160 = vpop.f32.mrb[0].mxu0
        %1161 = vdwg.mxu0
        %vm1162 = vcmp.ge.f32.partialorder %v1148, 0.0
        %vm1163 = vcmp.ge.f32.partialorder %v1151, 0.0
        %vm1164 = vcmp.ge.f32.partialorder %v1156, 0.0
        %vm1165 = vcmp.ge.f32.partialorder %v1159, 0.0
        %1166 = vset.pattern.permute.xlu0 22
        %1167 = vperm.xlu0 %1166, %v504
        %v1168 = vpop.permute.xlu0 %1167
        %1170 = vset.pattern.permute.xlu0 22
        %1171 = vperm.xlu0 %1170, %v505
        %v1172 = vpop.permute.xlu0 %1171
        %1174 = vset.pattern.permute.xlu0 22
        %1175 = vperm.xlu0 %1174, %v506
        %v1176 = vpop.permute.xlu0 %1175
        %1178 = vset.pattern.permute.xlu0 22
        %1179 = vperm.xlu0 %1178, %v507
        %v1180 = vpop.permute.xlu0 %1179
        %v1182 = vmul.f32 %v1168, %v1148
        %v1183 = vmul.f32 %v1172, %v1151
        %v1184 = vmul.f32 %v1176, %v1156
        %v1185 = vmul.f32 %v1180, %v1159
        %v1186 = vsel %vm1162, %v1148, %v1182
        %v1187 = vsel %vm1163, %v1151, %v1183
        %v1188 = vsel %vm1164, %v1156, %v1184
        %v1189 = vsel %vm1165, %v1159, %v1185
        %1190 = vadd.xlane.f32.xlu0 %v1186
        %v1191 = vpop.xlane.xlu0 %1190
        %1192 = vadd.xlane.f32.xlu0 %v1187
        %v1193 = vpop.xlane.xlu0 %1192
        %1194 = vadd.xlane.f32.xlu0 %v1188
        %v1195 = vpop.xlane.xlu0 %1194
        %1196 = vadd.xlane.f32.xlu0 %v1189
        %v1197 = vpop.xlane.xlu0 %1196
        %v1198 = vmul.f32 %v1191, %v665
        %v1199 = vmul.f32 %v1193, %v665
        %v1200 = vmul.f32 %v1195, %v665
        %v1201 = vmul.f32 %v1197, %v665
        %v1202 = vadd.f32 %v1198, %v1199
        %v1203 = vadd.f32 %v1202, %v1200
        %v1204 = vadd.f32 %v1203, %v1201
        %v1205 = vrot.slane %v1204, 4
        %v1206 = vadd.f32 %v1204, %v1205
        %v1207 = vrot.slane %v1206, 2
        %v1208 = vadd.f32 %v1206, %v1207
        %v1209 = vrot.slane %v1208, 1
        %v1210 = vadd.f32 %v1208, %v1209
        %v1211 = vmul.f32 %v1210, %v679
        %v1212 = vsub.f32 %v1186, %v1211
        %v1213 = vsub.f32 %v1187, %v1211
        %v1214 = vsub.f32 %v1188, %v1211
        %v1215 = vsub.f32 %v1189, %v1211
        %v1216 = vmul.f32 %v1212, %v1212
        %v1217 = vmul.f32 %v1213, %v1213
        %v1218 = vmul.f32 %v1214, %v1214
        %v1219 = vmul.f32 %v1215, %v1215
        %1220 = vadd.xlane.f32.xlu0 %v1216
        %v1221 = vpop.xlane.xlu0 %1220
        %1222 = vadd.xlane.f32.xlu0 %v1217
        %v1223 = vpop.xlane.xlu0 %1222
        %1224 = vadd.xlane.f32.xlu0 %v1218
        %v1225 = vpop.xlane.xlu0 %1224
        %1226 = vadd.xlane.f32.xlu0 %v1219
        %v1227 = vpop.xlane.xlu0 %1226
        %v1228 = vmul.f32 %v1221, %v665
        %v1229 = vmul.f32 %v1223, %v665
        %v1230 = vmul.f32 %v1225, %v665
        %v1231 = vmul.f32 %v1227, %v665
        %v1232 = vadd.f32 %v1228, %v1229
        %v1233 = vadd.f32 %v1232, %v1230
        %v1234 = vadd.f32 %v1233, %v1231
        %v1235 = vrot.slane %v1234, 4
        %v1236 = vadd.f32 %v1234, %v1235
        %v1237 = vrot.slane %v1236, 2
        %v1238 = vadd.f32 %v1236, %v1237
        %v1239 = vrot.slane %v1238, 1
        %v1240 = vadd.f32 %v1238, %v1239
        %v1241 = vmul.f32 %v1240, %v679
        %v1242 = vadd.f32 %v1241, 1e-08
        %v1243 = vrsqrt.pop %v1242
        %v1244 = vmul.f32 %v504, %v1243
        %v1245 = vmul.f32 %v505, %v1243
        %v1246 = vmul.f32 %v506, %v1243
        %v1247 = vmul.f32 %v507, %v1243
        %1249 = vset.pattern.permute.xlu0 13
        %1250 = vperm.xlu0 %1249, %v1244
        %v1251 = vpop.permute.xlu0 %1250
        %1254 = vset.pattern.permute.xlu0 13
        %1255 = vperm.xlu0 %1254, %v1245
        %v1256 = vpop.permute.xlu0 %1255
        %1259 = vset.pattern.permute.xlu0 13
        %1260 = vperm.xlu0 %1259, %v1246
        %v1261 = vpop.permute.xlu0 %1260
        %1264 = vset.pattern.permute.xlu0 13
        %1265 = vperm.xlu0 %1264, %v1247
        %v1266 = vpop.permute.xlu0 %1265
        %v1268 = vmul.f32 %v1212, %v1251
        %v1269 = vmul.f32 %v1213, %v1256
        %v1270 = vmul.f32 %v1214, %v1261
        %v1271 = vmul.f32 %v1215, %v1266
        %1272 = vset.pattern.permute.xlu0 14
        %1273 = vperm.xlu0 %1272, %v504
        %v1274 = vpop.permute.xlu0 %1273
        %1276 = vset.pattern.permute.xlu0 14
        %1277 = vperm.xlu0 %1276, %v505
        %v1278 = vpop.permute.xlu0 %1277
        %1280 = vset.pattern.permute.xlu0 14
        %1281 = vperm.xlu0 %1280, %v506
        %v1282 = vpop.permute.xlu0 %1281
        %1284 = vset.pattern.permute.xlu0 14
        %1285 = vperm.xlu0 %1284, %v507
        %v1286 = vpop.permute.xlu0 %1285
        %v1288 = vadd.f32 %v1268, %v1274
        %v1289 = vadd.f32 %v1269, %v1278
        %v1290 = vadd.f32 %v1270, %v1282
        %v1291 = vadd.f32 %v1271, %v1286
        %vm1292 = vcmp.ge.s32.totalorder %v513, 2
        %1293 = vrot.lane.b32.xlu0 %v1288, 2
        %v1294 = vpop.permute.xlu0 %1293
        %1295 = vrot.lane.b32.xlu0 %v1289, 2
        %v1296 = vpop.permute.xlu0 %1295
        %1297 = vrot.lane.b32.xlu0 %v1290, 2
        %v1298 = vpop.permute.xlu0 %1297
        %1299 = vrot.lane.b32.xlu0 %v1291, 2
        %v1300 = vpop.permute.xlu0 %1299
        %v1301 = vsel %vm1292, 1, 0
        %vm1302 = vcmp.eq.s32.totalorder %v1301, 1
        %v1303 = vsel %vm1302, %v1294, 0.0
        %v1304 = vsel %vm1302, %v1296, 0.0
        %v1305 = vsel %vm1302, %v1298, 0.0
        %v1306 = vsel %vm1302, %v1300, 0.0
        %vm1307 = vcmp.lt.s32.totalorder %v513, 126
        %1308 = vrot.lane.b32.xlu0 %v1288, 126
        %v1309 = vpop.permute.xlu0 %1308
        %1310 = vrot.lane.b32.xlu0 %v1289, 126
        %v1311 = vpop.permute.xlu0 %1310
        %1312 = vrot.lane.b32.xlu0 %v1290, 126
        %v1313 = vpop.permute.xlu0 %1312
        %1314 = vrot.lane.b32.xlu0 %v1291, 126
        %v1315 = vpop.permute.xlu0 %1314
        %v1316 = vsel %vm1307, 1, 0
        %vm1317 = vcmp.eq.s32.totalorder %v1316, 1
        %v1318 = vsel %vm1317, %v1309, 0.0
        %v1319 = vsel %vm1317, %v1311, 0.0
        %v1320 = vsel %vm1317, %v1313, 0.0
        %v1321 = vsel %vm1317, %v1315, 0.0
        %1322 = vset.pattern.permute.xlu0 15
        %1323 = vperm.xlu0 %1322, %v504
        %v1324 = vpop.permute.xlu0 %1323
        %1326 = vset.pattern.permute.xlu0 15
        %1327 = vperm.xlu0 %1326, %v505
        %v1328 = vpop.permute.xlu0 %1327
        %1330 = vset.pattern.permute.xlu0 15
        %1331 = vperm.xlu0 %1330, %v506
        %v1332 = vpop.permute.xlu0 %1331
        %1334 = vset.pattern.permute.xlu0 15
        %1335 = vperm.xlu0 %1334, %v507
        %v1336 = vpop.permute.xlu0 %1335
        %v1338 = vmul.f32 %v1324, %v1303
        %v1339 = vmul.f32 %v1328, %v1304
        %v1340 = vmul.f32 %v1332, %v1305
        %v1341 = vmul.f32 %v1336, %v1306
        %1342 = vset.pattern.permute.xlu0 16
        %1343 = vperm.xlu0 %1342, %v504
        %v1344 = vpop.permute.xlu0 %1343
        %1346 = vset.pattern.permute.xlu0 16
        %1347 = vperm.xlu0 %1346, %v505
        %v1348 = vpop.permute.xlu0 %1347
        %1350 = vset.pattern.permute.xlu0 16
        %1351 = vperm.xlu0 %1350, %v506
        %v1352 = vpop.permute.xlu0 %1351
        %1354 = vset.pattern.permute.xlu0 16
        %1355 = vperm.xlu0 %1354, %v507
        %v1356 = vpop.permute.xlu0 %1355
        %v1358 = vmul.f32 %v1344, %v1288
        %v1359 = vmul.f32 %v1348, %v1289
        %v1360 = vmul.f32 %v1352, %v1290
        %v1361 = vmul.f32 %v1356, %v1291
        %v1362 = vadd.f32 %v1338, %v1358
        %v1363 = vadd.f32 %v1339, %v1359
        %v1364 = vadd.f32 %v1340, %v1360
        %v1365 = vadd.f32 %v1341, %v1361
        %1366 = vset.pattern.permute.xlu0 17
        %1367 = vperm.xlu0 %1366, %v504
        %v1368 = vpop.permute.xlu0 %1367
        %1370 = vset.pattern.permute.xlu0 17
        %1371 = vperm.xlu0 %1370, %v505
        %v1372 = vpop.permute.xlu0 %1371
        %1374 = vset.pattern.permute.xlu0 17
        %1375 = vperm.xlu0 %1374, %v506
        %v1376 = vpop.permute.xlu0 %1375
        %1378 = vset.pattern.permute.xlu0 17
        %1379 = vperm.xlu0 %1378, %v507
        %v1380 = vpop.permute.xlu0 %1379
        %v1382 = vmul.f32 %v1368, %v1318
        %v1383 = vmul.f32 %v1372, %v1319
        %v1384 = vmul.f32 %v1376, %v1320
        %v1385 = vmul.f32 %v1380, %v1321
        %v1386 = vadd.f32 %v1362, %v1382
        %v1387 = vadd.f32 %v1363, %v1383
        %v1388 = vadd.f32 %v1364, %v1384
        %v1389 = vadd.f32 %v1365, %v1385
        %1390 = vset.pattern.permute.xlu0 18
        %1391 = vperm.xlu0 %1390, %v504
        %v1392 = vpop.permute.xlu0 %1391
        %1394 = vset.pattern.permute.xlu0 18
        %1395 = vperm.xlu0 %1394, %v505
        %v1396 = vpop.permute.xlu0 %1395
        %1398 = vset.pattern.permute.xlu0 18
        %1399 = vperm.xlu0 %1398, %v506
        %v1400 = vpop.permute.xlu0 %1399
        %1402 = vset.pattern.permute.xlu0 18
        %1403 = vperm.xlu0 %1402, %v507
        %v1404 = vpop.permute.xlu0 %1403
        %v1406 = vadd.f32 %v1386, %v1392
        %v1407 = vadd.f32 %v1387, %v1396
        %v1408 = vadd.f32 %v1388, %v1400
        %v1409 = vadd.f32 %v1389, %v1404
        %vm1410 = vcmp.ge.f32.partialorder %v1406, 0.0
        %vm1411 = vcmp.ge.f32.partialorder %v1407, 0.0
        %vm1412 = vcmp.ge.f32.partialorder %v1408, 0.0
        %vm1413 = vcmp.ge.f32.partialorder %v1409, 0.0
        %1414 = vset.pattern.permute.xlu0 23
        %1415 = vperm.xlu0 %1414, %v504
        %v1416 = vpop.permute.xlu0 %1415
        %1418 = vset.pattern.permute.xlu0 23
        %1419 = vperm.xlu0 %1418, %v505
        %v1420 = vpop.permute.xlu0 %1419
        %1422 = vset.pattern.permute.xlu0 23
        %1423 = vperm.xlu0 %1422, %v506
        %v1424 = vpop.permute.xlu0 %1423
        %1426 = vset.pattern.permute.xlu0 23
        %1427 = vperm.xlu0 %1426, %v507
        %v1428 = vpop.permute.xlu0 %1427
        %v1430 = vmul.f32 %v1416, %v1406
        %v1431 = vmul.f32 %v1420, %v1407
        %v1432 = vmul.f32 %v1424, %v1408
        %v1433 = vmul.f32 %v1428, %v1409
        %v1434 = vsel %vm1410, %v1406, %v1430
        %v1435 = vsel %vm1411, %v1407, %v1431
        %v1436 = vsel %vm1412, %v1408, %v1432
        %v1437 = vsel %vm1413, %v1409, %v1433
        %1438 = vadd.xlane.f32.xlu0 %v1434
        %v1439 = vpop.xlane.xlu0 %1438
        %1440 = vadd.xlane.f32.xlu0 %v1435
        %v1441 = vpop.xlane.xlu0 %1440
        %1442 = vadd.xlane.f32.xlu0 %v1436
        %v1443 = vpop.xlane.xlu0 %1442
        %1444 = vadd.xlane.f32.xlu0 %v1437
        %v1445 = vpop.xlane.xlu0 %1444
        %v1446 = vmul.f32 %v1439, %v665
        %v1447 = vmul.f32 %v1441, %v665
        %v1448 = vmul.f32 %v1443, %v665
        %v1449 = vmul.f32 %v1445, %v665
        %v1450 = vadd.f32 %v1446, %v1447
        %v1451 = vadd.f32 %v1450, %v1448
        %v1452 = vadd.f32 %v1451, %v1449
        %v1453 = vrot.slane %v1452, 4
        %v1454 = vadd.f32 %v1452, %v1453
        %v1455 = vrot.slane %v1454, 2
        %v1456 = vadd.f32 %v1454, %v1455
        %v1457 = vrot.slane %v1456, 1
        %v1458 = vadd.f32 %v1456, %v1457
        %v1459 = vmul.f32 %v1458, %v679
        %v1460 = vsub.f32 %v1434, %v1459
        %v1461 = vsub.f32 %v1435, %v1459
        %v1462 = vsub.f32 %v1436, %v1459
        %v1463 = vsub.f32 %v1437, %v1459
        %v1464 = vmul.f32 %v1460, %v1460
        %v1465 = vmul.f32 %v1461, %v1461
        %v1466 = vmul.f32 %v1462, %v1462
        %v1467 = vmul.f32 %v1463, %v1463
        %1468 = vadd.xlane.f32.xlu0 %v1464
        %v1469 = vpop.xlane.xlu0 %1468
        %1470 = vadd.xlane.f32.xlu0 %v1465
        %v1471 = vpop.xlane.xlu0 %1470
        %1472 = vadd.xlane.f32.xlu0 %v1466
        %v1473 = vpop.xlane.xlu0 %1472
        %1474 = vadd.xlane.f32.xlu0 %v1467
        %v1475 = vpop.xlane.xlu0 %1474
        %v1476 = vmul.f32 %v1469, %v665
        %v1477 = vmul.f32 %v1471, %v665
        %v1478 = vmul.f32 %v1473, %v665
        %v1479 = vmul.f32 %v1475, %v665
        %v1480 = vadd.f32 %v1476, %v1477
        %v1481 = vadd.f32 %v1480, %v1478
        %v1482 = vadd.f32 %v1481, %v1479
        %v1483 = vrot.slane %v1482, 4
        %v1484 = vadd.f32 %v1482, %v1483
        %v1485 = vrot.slane %v1484, 2
        %v1486 = vadd.f32 %v1484, %v1485
        %v1487 = vrot.slane %v1486, 1
        %v1488 = vadd.f32 %v1486, %v1487
        %v1489 = vmul.f32 %v1488, %v679
        %v1490 = vadd.f32 %v1489, 1e-08
        %v1491 = vrsqrt.pop %v1490
        %v1492 = vmul.f32 %v504, %v1491
        %v1493 = vmul.f32 %v505, %v1491
        %v1494 = vmul.f32 %v506, %v1491
        %v1495 = vmul.f32 %v507, %v1491
        %1497 = vset.pattern.permute.xlu0 19
        %1498 = vperm.xlu0 %1497, %v1492
        %v1499 = vpop.permute.xlu0 %1498
        %1502 = vset.pattern.permute.xlu0 19
        %1503 = vperm.xlu0 %1502, %v1493
        %v1504 = vpop.permute.xlu0 %1503
        %1507 = vset.pattern.permute.xlu0 19
        %1508 = vperm.xlu0 %1507, %v1494
        %v1509 = vpop.permute.xlu0 %1508
        %1512 = vset.pattern.permute.xlu0 19
        %1513 = vperm.xlu0 %1512, %v1495
        %v1514 = vpop.permute.xlu0 %1513
        %v1516 = vmul.f32 %v1460, %v1499
        %v1517 = vmul.f32 %v1461, %v1504
        %v1518 = vmul.f32 %v1462, %v1509
        %v1519 = vmul.f32 %v1463, %v1514
        %1520 = vset.pattern.permute.xlu0 20
        %1521 = vperm.xlu0 %1520, %v504
        %v1522 = vpop.permute.xlu0 %1521
        %1524 = vset.pattern.permute.xlu0 20
        %1525 = vperm.xlu0 %1524, %v505
        %v1526 = vpop.permute.xlu0 %1525
        %1528 = vset.pattern.permute.xlu0 20
        %1529 = vperm.xlu0 %1528, %v506
        %v1530 = vpop.permute.xlu0 %1529
        %1532 = vset.pattern.permute.xlu0 20
        %1533 = vperm.xlu0 %1532, %v507
        %v1534 = vpop.permute.xlu0 %1533
        %v1536 = vadd.f32 %v1516, %v1522
        %v1537 = vadd.f32 %v1517, %v1526
        %v1538 = vadd.f32 %v1518, %v1530
        %v1539 = vadd.f32 %v1519, %v1534
        %s1540 = scalar_lea.vmem %s368, 8
        %v1541 = vld [vmem:[%s1540] sm:$0xf]
        %v1542 = vld [vmem:[%s1540 + $0x4] sm:$0xf]
        %v1543 = vpack.c.bf16 %v1537, %v1536
        %v1544 = vpack.c.bf16 %v1539, %v1538
        %v1547 = vunpack.c.l.b16 %v1541
        %v1548 = vunpack.c.l.b16 %v1542
        %v1549 = vpack.c.b16 %v1548, %v1547
        %v1551 = vsel %vm1018, %v1549, 0
        %1553 = vmatprep.subr.bf16.mxu0 0
        %1554 = vmatpush1.bf16.msra.mxu0 %v1543
        %1555 = vmatprep.subr.bf16.mxu0 0
        %1556 = vmatpush1.bf16.msra.mxu0 %v1544
        %1557 = vmatprep.subr.bf16.mxu0 0
        %1558 = vmatpush1.bf16.msra.mxu0 0
        %1559 = vmatprep.subr.bf16.mxu0 0
        %1560 = vmatpush1.bf16.msra.mxu0 0
        %1561 = vmatprep.subr.bf16.mxu0 0
        %1562 = vmatpush1.bf16.msra.mxu0 0
        %1563 = vmatprep.subr.bf16.mxu0 0
        %1564 = vmatpush1.bf16.msra.mxu0 0
        %1565 = vmatprep.subr.bf16.mxu0 0
        %1566 = vmatpush1.bf16.msra.mxu0 0
        %1567 = vmatprep.subr.bf16.mxu0 0
        %1568 = vmatpush1.bf16.msra.mxu0 0
        %1569 = vmatprep.subr.bf16.mxu0 0
        %1570 = vmatpush1.bf16.msra.mxu0 0
        %1571 = vmatprep.subr.bf16.mxu0 0
        %1572 = vmatpush1.bf16.msra.mxu0 0
        %1573 = vmatprep.subr.bf16.mxu0 0
        %1574 = vmatpush1.bf16.msra.mxu0 0
        %1575 = vmatprep.subr.bf16.mxu0 0
        %1576 = vmatpush1.bf16.msra.mxu0 0
        %1577 = vmatprep.subr.bf16.mxu0 0
        %1578 = vmatpush1.bf16.msra.mxu0 0
        %1579 = vmatprep.subr.bf16.mxu0 0
        %1580 = vmatpush1.bf16.msra.mxu0 0
        %1581 = vmatprep.subr.bf16.mxu0 0
        %1582 = vmatpush1.bf16.msra.mxu0 0
        %1583 = vmatprep.subr.bf16.mxu0 0
        %1584 = vmatpush1.bf16.msra.mxu0 0
        %1585 = vmatprep.mubr.bf16.mxu0 0
        %1586 = vmatmul.mubr.bf16.gmra.mrb[0].mxu0 %v1551
        %v1587 = vpop.f32.mrb[0].mxu0
        %v1588 = vadd.f32 0.0, %v1587
        %v1589 = vpop.f32.mrb[0].mxu0
        %v1590 = vpop.f32.mrb[0].mxu0
        %v1591 = vadd.f32 0.0, %v1590
        %v1592 = vpop.f32.mrb[0].mxu0
        %1593 = vdwg.mxu0
        %v1594 = vadd.f32 %v1073, %v1588
        %v1595 = vadd.f32 %v1074, %v1591
        %1596 = vset.pattern.permute.xlu0 21
        %1597 = vperm.xlu0 %1596, %v504
        %v1598 = vpop.permute.xlu0 %1597
        %1600 = vset.pattern.permute.xlu0 21
        %1601 = vperm.xlu0 %1600, %v505
        %v1602 = vpop.permute.xlu0 %1601
        %v1604 = vadd.f32 %v1594, %v1598
        %v1605 = vadd.f32 %v1595, %v1602
        %1606 = vst [vmem:[#allocation2] sm:$0xff] %v1604
        %1607 = vst [vmem:[#allocation2 + $0x8] sm:$0xff] %v1605
        %p1608 = scmp.eq.s32.totalorder %s26, 1
        // Predicated region
        $region53: #{tpu_custom_call.1} parent=47 // pred_check
          %p1609 = pneg %p1608
        $region54: #{tpu_custom_call.1} parent=47 // pred_check_branch
          %1611 = sbr.rel (%p1609) target = $region56
        $region55: #{tpu_custom_call.1} parent=47 // pred_region
          %v1612 = vld [vmem:[%s358] sm:$0xff]
          %v1613 = vld [vmem:[%s358 + $0x8] sm:$0xff]
          %s1614 = scalar_lea.vmem %s2, 8
          %v1615 = vld [vmem:[%s1614] sm:$0xf]
          %v1616 = vld [vmem:[%s1614 + $0x4] sm:$0xf]
          %v1617 = vpack.c.bf16 %v1605, %v1604
          %1619 = vset.pattern.permute.xlu0 3
          %1620 = vperm.xlu0 %1619, %v384
          %v1621 = vpop.permute.xlu0 %1620
          %1624 = vset.pattern.permute.xlu0 3
          %1625 = vperm.xlu0 %1624, %v385
          %v1626 = vpop.permute.xlu0 %1625
          %v1630 = vunpack.c.l.b16 %v1615
          %v1631 = vunpack.c.l.b16 %v1616
          %v1632 = vpack.c.b16 %v1631, %v1630
          %v1634 = vsel %vm549, %v1632, 0
          %1636 = vmatprep.subr.bf16.mxu0 0
          %1637 = vmatpush1.bf16.msra.mxu0 %v1617
          %1638 = vmatprep.subr.bf16.mxu0 0
          %1639 = vmatpush1.bf16.msra.mxu0 0
          %1640 = vmatprep.subr.bf16.mxu0 0
          %1641 = vmatpush1.bf16.msra.mxu0 0
          %1642 = vmatprep.subr.bf16.mxu0 0
          %1643 = vmatpush1.bf16.msra.mxu0 0
          %1644 = vmatprep.subr.bf16.mxu0 0
          %1645 = vmatpush1.bf16.msra.mxu0 0
          %1646 = vmatprep.subr.bf16.mxu0 0
          %1647 = vmatpush1.bf16.msra.mxu0 0
          %1648 = vmatprep.subr.bf16.mxu0 0
          %1649 = vmatpush1.bf16.msra.mxu0 0
          %1650 = vmatprep.subr.bf16.mxu0 0
          %1651 = vmatpush1.bf16.msra.mxu0 0
          %1652 = vmatprep.subr.bf16.mxu0 0
          %1653 = vmatpush1.bf16.msra.mxu0 0
          %1654 = vmatprep.subr.bf16.mxu0 0
          %1655 = vmatpush1.bf16.msra.mxu0 0
          %1656 = vmatprep.subr.bf16.mxu0 0
          %1657 = vmatpush1.bf16.msra.mxu0 0
          %1658 = vmatprep.subr.bf16.mxu0 0
          %1659 = vmatpush1.bf16.msra.mxu0 0
          %1660 = vmatprep.subr.bf16.mxu0 0
          %1661 = vmatpush1.bf16.msra.mxu0 0
          %1662 = vmatprep.subr.bf16.mxu0 0
          %1663 = vmatpush1.bf16.msra.mxu0 0
          %1664 = vmatprep.subr.bf16.mxu0 0
          %1665 = vmatpush1.bf16.msra.mxu0 0
          %1666 = vmatprep.subr.bf16.mxu0 0
          %1667 = vmatpush1.bf16.msra.mxu0 0
          %1668 = vmatprep.mubr.bf16.mxu0 0
          %1669 = vmatmul.mubr.bf16.gmra.mrb[0].mxu0 %v1634
          %v1670 = vpop.f32.mrb[0].mxu0
          %v1671 = vadd.f32 %v1621, %v1670
          %v1672 = vpop.f32.mrb[0].mxu0
          %v1673 = vpop.f32.mrb[0].mxu0
          %v1674 = vadd.f32 %v1626, %v1673
          %v1675 = vpop.f32.mrb[0].mxu0
          %1676 = vdwg.mxu0
          %v1677 = vmax.f32 %v1671, 0.0
          %v1678 = vmax.f32 %v1674, 0.0
          %v1679 = vmul.f32 %v1612, %v1677
          %v1680 = vmul.f32 %v1613, %v1678
          %1681 = vst [vmem:[%s353] sm:$0xff] %v1679
          %1682 = vst [vmem:[%s353 + $0x8] sm:$0xff] %v1680
        $region56: #{tpu_custom_call.1} parent=47 // pred_fallthru
          _
        %s1683 = sand.u32 %s215, 1
        %s1684 = scalar_lea.sflag [#allocation4], %s1683
        %s1685 = sand.u32 %s215, 1
        %s1686 = smul.addr %s1685, 16
        %s1687 = scalar_lea.vmem [#allocation3], %s1686
        // Predicated region
        $region57: #{tpu_custom_call.1} parent=47 // pred_check
          %p1688 = pneg %p225
        $region58: #{tpu_custom_call.1} parent=47 // pred_check_branch
          %1690 = sbr.rel (%p1688) target = $region60
        $region59: #{tpu_custom_call.1} parent=47 // pred_region
          %s1692 = ssub.s32 256, 256
          %1693 = vsyncadd %s1684, %s1692
          %s1694 = smul.addr %s25, 2
          %s1695 = smul.addr %s1694, 128
          %s1696 = scalar_lea.hbm %s7, %s1695
          %s1697 = sshll.u32 %s1687, 4
          %s1698 = int_to_ptr.vmem [resolvable:$true] %s1697
          %1703 = dma.vmem_to_hbm [thread:$0]  %s1698, 256, %s1696, %s1684, 128, 128, 8
        $region60: #{tpu_custom_call.1} parent=47 // pred_fallthru
          _
      $region48: #{tpu_custom_call.1} parent=5 // pred_fallthru
        _
      %p1704 = scmp.le.s32.totalorder 2, %s16
      // Predicated region
      $region61: #{tpu_custom_call.1} parent=5 // pred_check
        %p1705 = pneg %p1704
      $region62: #{tpu_custom_call.1} parent=5 // pred_check_branch
        %1707 = sbr.rel (%p1705) target = $region64
      $region63: #{tpu_custom_call.1} parent=5 // pred_region
        %s1708 = ssub.s32 %s16, 2
        // Predicated region
        $region65: #{tpu_custom_call.1} parent=63 // pred_check
          %p1709 = pneg %p231
        $region66: #{tpu_custom_call.1} parent=63 // pred_check_branch
          %1711 = sbr.rel (%p1709) target = $region68
        $region67: #{tpu_custom_call.1} parent=63 // pred_region
          %s1712 = sand.u32 %s216, 1
          %s1713 = scalar_lea.sflag [#allocation4], %s1712
          %s1714 = sand.u32 %s216, 1
          %s1715 = smul.addr %s1714, 16
          %s1716 = scalar_lea.vmem [#allocation3], %s1715
          %1717 = dma.done %s1713, 256
        $region68: #{tpu_custom_call.1} parent=63 // pred_fallthru
          _
      $region64: #{tpu_custom_call.1} parent=5 // pred_fallthru
        _
    $region6: #{tpu_custom_call.1} parent=1 // loop_footer
      %s20 = sadd.s32 1, %s16
    $region7: #{tpu_custom_call.1} parent=1 // loop_footer_branch
      %15 = sbr.rel target = $region3
    $region8: #{tpu_custom_call.1} parent=1 // loop_exit
      _
    %1718 = vsyncpa [#allocation4], 1
    %s1719 = scalar_lea.sflag [#allocation4], 1
    %1720 = vsyncpa %s1719, 1

</llo_original>
